<compile_context>
chip_gen: v6e
topology: v6e:2x2x1
jax: 0.10.0
libtpu: 0.0.40
codegen_flags: <defaults>
</compile_context>

<pallas_src>
import jax
import jax.numpy as jnp
from jax.experimental import pallas as pl
from jax.experimental.pallas import tpu as pltpu

_LANE = 128  # TPU vreg lane width — all last dims are padded to a multiple.


def _round_up(x, m):
    return ((x + m - 1) // m) * m


def _pad2d(a, rows, cols):
    return jnp.pad(a, ((0, rows - a.shape[0]), (0, cols - a.shape[1])))


def _pad3d(a, rows, cols):
    return jnp.pad(a, ((0, 0), (0, rows - a.shape[1]), (0, cols - a.shape[2])))


# ----------------------------------------------------------------------------
# Kernel: one graph per grid step, everything lane-padded and fused.
# ----------------------------------------------------------------------------
def gvae_kernel(a_ref, x_ref, w1_ref, b1_ref, wenc_ref, benc_ref,
                wd1_ref, bd1_ref, wd2_ref, bd2_ref, eps_ref,
                recon_ref, ml_ref):
    a = a_ref[0]                       # [NP, NP]  (matmul dtype)
    x = x_ref[0]                       # [NP, FP]

    # --- GCN layer 1: relu(A @ X @ W1 + b1), ordered as (A @ X) @ W1 --------
    ax = jnp.dot(a, x, preferred_element_type=jnp.float32)            # [NP, FP]
    h = jnp.dot(ax.astype(a.dtype), w1_ref[...],
                preferred_element_type=jnp.float32) + b1_ref[...]      # [NP, HP]
    h = jnp.maximum(h, 0.0)

    # --- fused mean/logstd heads: (A @ H) @ [Wm|Wl] + [bm|bl] ---------------
    ah = jnp.dot(a, h.astype(a.dtype),
                 preferred_element_type=jnp.float32)                   # [NP, HP]
    ml = jnp.dot(ah.astype(a.dtype), wenc_ref[...],
                 preferred_element_type=jnp.float32) + benc_ref[...]   # [NP, 2LP]

    lp = ml.shape[-1] // 2
    mu = ml[:, :lp]                    # lane-aligned (128-boundary) slices
    logstd = ml[:, lp:]

    # --- reparameterize (f32 elementwise): z = mu + eps * exp(logstd) ------
    z = mu + eps_ref[0] * jnp.exp(logstd)                              # [NP, LP]

    # --- decoder: Sigmoid(Linear(ReLU(Linear(z)))) --------------------------
    d1 = jnp.dot(z.astype(a.dtype), wd1_ref[...],
                 preferred_element_type=jnp.float32) + bd1_ref[...]
    d1 = jnp.maximum(d1, 0.0)
    d2 = jnp.dot(d1.astype(a.dtype), wd2_ref[...],
                 preferred_element_type=jnp.float32) + bd2_ref[...]

    recon_ref[0] = jax.nn.sigmoid(d2)
    ml_ref[0] = ml


# ----------------------------------------------------------------------------
# Plain-JAX glue: dense D^-1/2 (A + I) D^-1/2 matching PyG gcn_norm semantics.
# ----------------------------------------------------------------------------
def build_norm_adj(edge_index, num_nodes):
    src, dst = edge_index[0], edge_index[1]
    a = jnp.zeros((num_nodes, num_nodes), jnp.float32)
    # scatter-ADD (duplicate edges accumulate); messages flow source -> target,
    # so the dense aggregation matrix is A[target, source].
    a = a.at[dst, src].add(1.0)
    # add_remaining_self_loops: only add a self-loop where none exists.
    diag = jnp.diagonal(a)
    eye = jnp.eye(num_nodes, dtype=jnp.float32)
    a = a + eye * jnp.where(diag > 0.0, 0.0, 1.0)[:, None]
    deg = a.sum(axis=1)
    d_inv_sqrt = jnp.where(deg > 0.0, 1.0 / jnp.sqrt(deg), 0.0)
    return a * d_inv_sqrt[:, None] * d_inv_sqrt[None, :]


def build_norm_adj_batched(edge_index, num_nodes):
    """edge_index: [B, 2, E] -> [B, N, N] normalized dense adjacency."""
    return jax.vmap(lambda ei: build_norm_adj(ei, num_nodes))(edge_index)


# ----------------------------------------------------------------------------
# Batched forward: B independent graphs, one grid step per graph.
# ----------------------------------------------------------------------------
def gvae_forward_batched(params, x, a_norm, eps, *, matmul_dtype=jnp.bfloat16):
    """x: [B,N,F], a_norm: [B,N,N], eps: [B,N,L] -> (recon, mu, logstd)."""
    B, N, F = x.shape
    H = params["w1"].shape[1]
    L = params["wm"].shape[1]

    NP = _round_up(N, _LANE)
    FP = _round_up(F, _LANE)
    HP = _round_up(H, _LANE)
    LP = _round_up(L, _LANE)

    md = jnp.dtype(matmul_dtype)

    # zero-pad to lane-aligned shapes; matmul operands in bf16, the rest f32.
    a_p = _pad3d(a_norm, NP, NP).astype(md)
    x_p = _pad3d(x, NP, FP).astype(md)
    eps_p = _pad3d(eps, NP, LP).astype(jnp.float32)

    w1_p = _pad2d(params["w1"], FP, HP).astype(md)
    b1_p = _pad2d(params["b1"], 1, HP).astype(jnp.float32)

    # fuse mean/logstd head weights into one [HP, 2*LP] block (each head
    # occupies its own 128-lane-aligned slab so the in-kernel split is free).
    wenc = jnp.zeros((HP, 2 * LP), md)
    wenc = wenc.at[:H, :L].set(params["wm"].astype(md))
    wenc = wenc.at[:H, LP:LP + L].set(params["wl"].astype(md))
    benc = jnp.zeros((1, 2 * LP), jnp.float32)
    benc = benc.at[:, :L].set(params["bm"])
    benc = benc.at[:, LP:LP + L].set(params["bl"])

    wd1_p = _pad2d(params["wd1"], LP, HP).astype(md)
    bd1_p = _pad2d(params["bd1"], 1, HP).astype(jnp.float32)
    wd2_p = _pad2d(params["wd2"], HP, FP).astype(md)
    bd2_p = _pad2d(params["bd2"], 1, FP).astype(jnp.float32)

    per_graph = lambda shape: pl.BlockSpec((1,) + shape, lambda b: (b, 0, 0))
    shared = lambda shape: pl.BlockSpec(shape, lambda b, _s=shape: (0,) * len(_s))

    in_specs = [
        per_graph((NP, NP)),          # A_norm
        per_graph((NP, FP)),          # X
        shared((FP, HP)),             # W1
        shared((1, HP)),              # b1
        shared((HP, 2 * LP)),         # W_enc  (Wm | Wl)
        shared((1, 2 * LP)),          # b_enc  (bm | bl)
        shared((LP, HP)),             # Wd1
        shared((1, HP)),              # bd1
        shared((HP, FP)),             # Wd2
        shared((1, FP)),              # bd2
        per_graph((NP, LP)),          # eps
    ]
    out_specs = (per_graph((NP, FP)), per_graph((NP, 2 * LP)))
    out_shape = (jax.ShapeDtypeStruct((B, NP, FP), jnp.float32),
                 jax.ShapeDtypeStruct((B, NP, 2 * LP), jnp.float32))

    itemsize = md.itemsize
    # MACs per graph: (A@X)@W1, (A@H)@Wenc, decoder linears.
    macs = (NP * NP * FP + NP * FP * HP          # layer 1
            + NP * NP * HP + NP * HP * 2 * LP    # fused heads
            + NP * LP * HP + NP * HP * FP)       # decoder
    flops = 2 * B * macs
    transcendentals = B * NP * (LP + FP)  # exp (reparam) + sigmoid
    bytes_accessed = (B * (NP * NP + NP * FP) * itemsize          # A, X
                      + B * NP * LP * 4                           # eps
                      + (FP * HP + HP * 2 * LP + LP * HP + HP * FP) * itemsize
                      + (HP + 2 * LP + HP + FP) * 4               # biases
                      + B * (NP * FP + NP * 2 * LP) * 4)          # outputs

    recon_p, ml_p = pl.pallas_call(
        gvae_kernel,
        grid=(B,),
        in_specs=in_specs,
        out_specs=out_specs,
        out_shape=out_shape,
        compiler_params=pltpu.CompilerParams(
            dimension_semantics=("parallel",)),
        cost_estimate=pl.CostEstimate(
            flops=flops,
            transcendentals=transcendentals,
            bytes_accessed=bytes_accessed),
    )(a_p, x_p, w1_p, b1_p, wenc, benc, wd1_p, bd1_p, wd2_p, bd2_p, eps_p)

    recon = recon_p[:, :N, :F]
    mu = ml_p[:, :N, :L]
    logstd = ml_p[:, :N, LP:LP + L]
    return recon, mu, logstd


def gvae_forward(params, x, edge_index, eps, *, matmul_dtype=jnp.bfloat16):
    """Single-graph forward, matching the torch module's forward(x, edge_index)."""
    a_norm = build_norm_adj(edge_index, x.shape[0])
    recon, mu, logstd = gvae_forward_batched(
        params, x[None], a_norm[None], eps[None], matmul_dtype=matmul_dtype)
    return recon[0], mu[0], logstd[0]


# ----------------------------------------------------------------------------
# Pure-JAX reference (f32) for validation.
# ----------------------------------------------------------------------------
def gvae_reference(params, x, a_norm, eps):
    def one(xg, ag, eg):
        h = jax.nn.relu(ag @ (xg @ params["w1"]) + params["b1"])
        mu = ag @ (h @ params["wm"]) + params["bm"]
        logstd = ag @ (h @ params["wl"]) + params["bl"]
        z = mu + eg * jnp.exp(logstd)
        d1 = jax.nn.relu(z @ params["wd1"] + params["bd1"])
        recon = jax.nn.sigmoid(d1 @ params["wd2"] + params["bd2"])
        return recon, mu, logstd
    return jax.vmap(one)(x, a_norm, eps)


def init_params(key, in_features, hidden_dim, latent_dim):
    ks = jax.random.split(key, 10)

    def glorot(k, shape):
        scale = jnp.sqrt(2.0 / (shape[0] + shape[1]))
        return (scale * jax.random.normal(k, shape)).astype(jnp.float32)

    return {
        "w1":  glorot(ks[0], (in_features, hidden_dim)),
        "b1":  jnp.zeros((1, hidden_dim), jnp.float32),
        "wm":  glorot(ks[1], (hidden_dim, latent_dim)),
        "bm":  jnp.zeros((1, latent_dim), jnp.float32),
        "wl":  glorot(ks[2], (hidden_dim, latent_dim)),
        "bl":  jnp.zeros((1, latent_dim), jnp.float32),
        "wd1": glorot(ks[3], (latent_dim, hidden_dim)),
        "bd1": (0.01 * jax.random.normal(ks[4], (1, hidden_dim))).astype(jnp.float32),
        "wd2": glorot(ks[5], (hidden_dim, in_features)),
        "bd2": (0.01 * jax.random.normal(ks[6], (1, in_features))).astype(jnp.float32),
    }


if __name__ == "__main__":
    key = jax.random.PRNGKey(0)
    k_param, k_x, k_edge, k_eps = jax.random.split(key, 4)

    batch = 4
    num_nodes = 16
    in_features = 8
    hidden_dim = 32
    latent_dim = 16
    num_edges = 32

    params = init_params(k_param, in_features, hidden_dim, latent_dim)

    x = jax.random.normal(k_x, (batch, num_nodes, in_features), dtype=jnp.float32)
    edge_index = jax.random.randint(k_edge, (batch, 2, num_edges), 0, num_nodes,
                                    dtype=jnp.int32)
    # eps ~ N(0,1) (torch.randn_like in reparameterize), passed in explicitly.
    eps = jax.random.normal(k_eps, (batch, num_nodes, latent_dim), dtype=jnp.float32)

    a_norm = build_norm_adj_batched(edge_index, num_nodes)

    # --- correctness check: f32 matmul path vs pure-JAX reference ----------
    recon32, mu32, logstd32 = gvae_forward_batched(
        params, x, a_norm, eps, matmul_dtype=jnp.float32)
    recon_ref, mu_ref, logstd_ref = gvae_reference(params, x, a_norm, eps)
    jax.block_until_ready((recon32, mu32, logstd32))

    assert recon32.shape == (batch, num_nodes, in_features)
    assert mu32.shape == (batch, num_nodes, latent_dim)
    assert logstd32.shape == (batch, num_nodes, latent_dim)
    for got, want in ((recon32, recon_ref), (mu32, mu_ref), (logstd32, logstd_ref)):
        assert bool(jnp.all(jnp.isfinite(got)))
        err = float(jnp.max(jnp.abs(got - want)))
        assert err < 5e-2, err

    # --- perf path: bf16 matmul operands (f32 accumulation / elementwise) --
    recon, mu, logstd = gvae_forward_batched(params, x, a_norm, eps,
                                             matmul_dtype=jnp.bfloat16)
    jax.block_until_ready((recon, mu, logstd))
    assert recon.shape == (batch, num_nodes, in_features)
    assert bool(jnp.all(jnp.isfinite(recon)))
    assert bool(jnp.all((recon >= 0.0) & (recon <= 1.0)))
    assert bool(jnp.all(jnp.isfinite(mu))) and bool(jnp.all(jnp.isfinite(logstd)))

    # single-graph API parity with the torch module's forward(x, edge_index)
    r1, m1, l1 = gvae_forward(params, x[0], edge_index[0], eps[0])
    jax.block_until_ready((r1, m1, l1))
    assert r1.shape == (num_nodes, in_features)
    assert m1.shape == (num_nodes, latent_dim) and l1.shape == (num_nodes, latent_dim)

    print("KERNEL_OK")
</pallas_src>

<mosaic_0001>
module attributes {stable_mosaic.version = 11 : i64} {
  func.func @gvae_kernel(%arg0: i32, %arg1: memref<1x128x128xf32, #tpu.memory_space<vmem>>, %arg2: memref<1x128x128xf32, #tpu.memory_space<vmem>>, %arg3: memref<128x128xf32, #tpu.memory_space<vmem>>, %arg4: memref<1x128xf32, #tpu.memory_space<vmem>>, %arg5: memref<128x256xf32, #tpu.memory_space<vmem>>, %arg6: memref<1x256xf32, #tpu.memory_space<vmem>>, %arg7: memref<128x128xf32, #tpu.memory_space<vmem>>, %arg8: memref<1x128xf32, #tpu.memory_space<vmem>>, %arg9: memref<128x128xf32, #tpu.memory_space<vmem>>, %arg10: memref<1x128xf32, #tpu.memory_space<vmem>>, %arg11: memref<1x128x128xf32, #tpu.memory_space<vmem>>, %arg12: memref<1x128x128xf32, #tpu.memory_space<vmem>>, %arg13: memref<1x128x256xf32, #tpu.memory_space<vmem>>) attributes {dimension_semantics = [#tpu.dimension_semantics<parallel>], iteration_bounds = array<i64: 4>, scalar_prefetch = 0 : i64, scratch_operands = 0 : i64, tpu.core_type = #tpu.core_type<tc>, window_params = [{transform_indices = @transform_0, window_bounds = array<i64: 1, 128, 128>}, {transform_indices = @transform_1, window_bounds = array<i64: 1, 128, 128>}, {pipeline_mode = #tpu.pipeline_mode<synchronous>, transform_indices = @transform_2, window_bounds = array<i64: 128, 128>}, {pipeline_mode = #tpu.pipeline_mode<synchronous>, transform_indices = @transform_3, window_bounds = array<i64: 1, 128>}, {pipeline_mode = #tpu.pipeline_mode<synchronous>, transform_indices = @transform_4, window_bounds = array<i64: 128, 256>}, {pipeline_mode = #tpu.pipeline_mode<synchronous>, transform_indices = @transform_5, window_bounds = array<i64: 1, 256>}, {pipeline_mode = #tpu.pipeline_mode<synchronous>, transform_indices = @transform_6, window_bounds = array<i64: 128, 128>}, {pipeline_mode = #tpu.pipeline_mode<synchronous>, transform_indices = @transform_7, window_bounds = array<i64: 1, 128>}, {pipeline_mode = #tpu.pipeline_mode<synchronous>, transform_indices = @transform_8, window_bounds = array<i64: 128, 128>}, {pipeline_mode = #tpu.pipeline_mode<synchronous>, transform_indices = @transform_9, window_bounds = array<i64: 1, 128>}, {transform_indices = @transform_10, window_bounds = array<i64: 1, 128, 128>}, {transform_indices = @transform_11, window_bounds = array<i64: 1, 128, 128>}, {transform_indices = @transform_12, window_bounds = array<i64: 1, 128, 256>}]} {
    %c0 = arith.constant 0 : index
    %c0_0 = arith.constant 0 : index
    %c0_1 = arith.constant 0 : index
    %0 = vector.load %arg1[%c0, %c0_0, %c0_1] : memref<1x128x128xf32, #tpu.memory_space<vmem>>, vector<1x128x128xf32>
    %1 = vector.shape_cast %0 : vector<1x128x128xf32> to vector<128x128xf32>
    %c0_2 = arith.constant 0 : index
    %c0_3 = arith.constant 0 : index
    %c0_4 = arith.constant 0 : index
    %2 = vector.load %arg2[%c0_2, %c0_3, %c0_4] : memref<1x128x128xf32, #tpu.memory_space<vmem>>, vector<1x128x128xf32>
    %3 = vector.shape_cast %2 : vector<1x128x128xf32> to vector<128x128xf32>
    %cst = arith.constant dense<0.000000e+00> : vector<128x128xf32>
    %4 = tpu.matmul %1, %3, %cst {dimension_numbers = #tpu.dot_dimension_numbers<[1], [0], [0], [1], [0, 0, 1, 1], [], []>} : vector<128x128xf32>, vector<128x128xf32>, vector<128x128xf32> -> vector<128x128xf32>
    %c0_5 = arith.constant 0 : index
    %c0_6 = arith.constant 0 : index
    %5 = vector.load %arg3[%c0_5, %c0_6] : memref<128x128xf32, #tpu.memory_space<vmem>>, vector<128x128xf32>
    %cst_7 = arith.constant dense<0.000000e+00> : vector<128x128xf32>
    %6 = tpu.matmul %4, %5, %cst_7 {dimension_numbers = #tpu.dot_dimension_numbers<[1], [0], [0], [1], [0, 0, 1, 1], [], []>} : vector<128x128xf32>, vector<128x128xf32>, vector<128x128xf32> -> vector<128x128xf32>
    %c0_8 = arith.constant 0 : index
    %c0_9 = arith.constant 0 : index
    %7 = vector.load %arg4[%c0_8, %c0_9] : memref<1x128xf32, #tpu.memory_space<vmem>>, vector<1x128xf32>
    %8 = vector.broadcast %7 : vector<1x128xf32> to vector<128x128xf32>
    %9 = arith.addf %6, %8 : vector<128x128xf32>
    %cst_10 = arith.constant 0.000000e+00 : f32
    %10 = vector.broadcast %cst_10 : f32 to vector<128x128xf32>
    %11 = arith.maximumf %9, %10 : vector<128x128xf32>
    %cst_11 = arith.constant dense<0.000000e+00> : vector<128x128xf32>
    %12 = tpu.matmul %1, %11, %cst_11 {dimension_numbers = #tpu.dot_dimension_numbers<[1], [0], [0], [1], [0, 0, 1, 1], [], []>} : vector<128x128xf32>, vector<128x128xf32>, vector<128x128xf32> -> vector<128x128xf32>
    %c0_12 = arith.constant 0 : index
    %c0_13 = arith.constant 0 : index
    %13 = vector.load %arg5[%c0_12, %c0_13] : memref<128x256xf32, #tpu.memory_space<vmem>>, vector<128x256xf32>
    %cst_14 = arith.constant dense<0.000000e+00> : vector<128x256xf32>
    %14 = tpu.matmul %12, %13, %cst_14 {dimension_numbers = #tpu.dot_dimension_numbers<[1], [0], [0], [1], [0, 0, 1, 1], [], []>} : vector<128x128xf32>, vector<128x256xf32>, vector<128x256xf32> -> vector<128x256xf32>
    %c0_15 = arith.constant 0 : index
    %c0_16 = arith.constant 0 : index
    %15 = vector.load %arg6[%c0_15, %c0_16] : memref<1x256xf32, #tpu.memory_space<vmem>>, vector<1x256xf32>
    %16 = vector.broadcast %15 : vector<1x256xf32> to vector<128x256xf32>
    %17 = arith.addf %14, %16 : vector<128x256xf32>
    %18 = vector.extract_strided_slice %17 {offsets = [0, 0], sizes = [128, 128], strides = [1, 1]} : vector<128x256xf32> to vector<128x128xf32>
    %19 = vector.extract_strided_slice %17 {offsets = [0, 128], sizes = [128, 128], strides = [1, 1]} : vector<128x256xf32> to vector<128x128xf32>
    %c0_17 = arith.constant 0 : index
    %c0_18 = arith.constant 0 : index
    %c0_19 = arith.constant 0 : index
    %20 = vector.load %arg11[%c0_17, %c0_18, %c0_19] : memref<1x128x128xf32, #tpu.memory_space<vmem>>, vector<1x128x128xf32>
    %21 = vector.shape_cast %20 : vector<1x128x128xf32> to vector<128x128xf32>
    %22 = math.exp %19 : vector<128x128xf32>
    %23 = arith.mulf %21, %22 : vector<128x128xf32>
    %24 = arith.addf %18, %23 : vector<128x128xf32>
    %c0_20 = arith.constant 0 : index
    %c0_21 = arith.constant 0 : index
    %25 = vector.load %arg7[%c0_20, %c0_21] : memref<128x128xf32, #tpu.memory_space<vmem>>, vector<128x128xf32>
    %cst_22 = arith.constant dense<0.000000e+00> : vector<128x128xf32>
    %26 = tpu.matmul %24, %25, %cst_22 {dimension_numbers = #tpu.dot_dimension_numbers<[1], [0], [0], [1], [0, 0, 1, 1], [], []>} : vector<128x128xf32>, vector<128x128xf32>, vector<128x128xf32> -> vector<128x128xf32>
    %c0_23 = arith.constant 0 : index
    %c0_24 = arith.constant 0 : index
    %27 = vector.load %arg8[%c0_23, %c0_24] : memref<1x128xf32, #tpu.memory_space<vmem>>, vector<1x128xf32>
    %28 = vector.broadcast %27 : vector<1x128xf32> to vector<128x128xf32>
    %29 = arith.addf %26, %28 : vector<128x128xf32>
    %cst_25 = arith.constant 0.000000e+00 : f32
    %30 = vector.broadcast %cst_25 : f32 to vector<128x128xf32>
    %31 = arith.maximumf %29, %30 : vector<128x128xf32>
    %c0_26 = arith.constant 0 : index
    %c0_27 = arith.constant 0 : index
    %32 = vector.load %arg9[%c0_26, %c0_27] : memref<128x128xf32, #tpu.memory_space<vmem>>, vector<128x128xf32>
    %cst_28 = arith.constant dense<0.000000e+00> : vector<128x128xf32>
    %33 = tpu.matmul %31, %32, %cst_28 {dimension_numbers = #tpu.dot_dimension_numbers<[1], [0], [0], [1], [0, 0, 1, 1], [], []>} : vector<128x128xf32>, vector<128x128xf32>, vector<128x128xf32> -> vector<128x128xf32>
    %c0_29 = arith.constant 0 : index
    %c0_30 = arith.constant 0 : index
    %34 = vector.load %arg10[%c0_29, %c0_30] : memref<1x128xf32, #tpu.memory_space<vmem>>, vector<1x128xf32>
    %35 = vector.broadcast %34 : vector<1x128xf32> to vector<128x128xf32>
    %36 = arith.addf %33, %35 : vector<128x128xf32>
    %37 = arith.negf %36 : vector<128x128xf32>
    %38 = math.exp %37 : vector<128x128xf32>
    %cst_31 = arith.constant 1.000000e+00 : f32
    %39 = vector.broadcast %cst_31 : f32 to vector<128x128xf32>
    %40 = arith.addf %39, %38 : vector<128x128xf32>
    %41 = arith.divf %39, %40 : vector<128x128xf32>
    %c0_32 = arith.constant 0 : index
    %c0_33 = arith.constant 0 : index
    %c0_34 = arith.constant 0 : index
    %42 = vector.load %arg12[%c0_32, %c0_33, %c0_34] : memref<1x128x128xf32, #tpu.memory_space<vmem>>, vector<1x128x128xf32>
    %43 = vector.shape_cast %42 : vector<1x128x128xf32> to vector<128x128xf32>
    %44 = vector.shape_cast %41 : vector<128x128xf32> to vector<1x128x128xf32>
    tpu.vector_store %arg12[%c0_32, %c0_33, %c0_34], %44 {strides = array<i32>} : memref<1x128x128xf32, #tpu.memory_space<vmem>>, vector<1x128x128xf32>,
    %c0_35 = arith.constant 0 : index
    %c0_36 = arith.constant 0 : index
    %c0_37 = arith.constant 0 : index
    %45 = vector.load %arg13[%c0_35, %c0_36, %c0_37] : memref<1x128x256xf32, #tpu.memory_space<vmem>>, vector<1x128x256xf32>
    %46 = vector.shape_cast %45 : vector<1x128x256xf32> to vector<128x256xf32>
    %47 = vector.shape_cast %17 : vector<128x256xf32> to vector<1x128x256xf32>
    tpu.vector_store %arg13[%c0_35, %c0_36, %c0_37], %47 {strides = array<i32>} : memref<1x128x256xf32, #tpu.memory_space<vmem>>, vector<1x128x256xf32>,
    return
  }
  func.func @transform_0(%arg0: i32) -> (i32, i32, i32) {
    %c0_i32 = arith.constant 0 : i32
    %c0_i32_0 = arith.constant 0 : i32
    %c0_i32_1 = arith.constant 0 : i32
    return %arg0, %c0_i32, %c0_i32_0 : i32, i32, i32
  }
  func.func @transform_1(%arg0: i32) -> (i32, i32, i32) {
    %c0_i32 = arith.constant 0 : i32
    %c0_i32_0 = arith.constant 0 : i32
    %c0_i32_1 = arith.constant 0 : i32
    return %arg0, %c0_i32, %c0_i32_0 : i32, i32, i32
  }
  func.func @transform_2(%arg0: i32) -> (i32, i32) {
    %c0_i32 = arith.constant 0 : i32
    %c0_i32_0 = arith.constant 0 : i32
    %c0_i32_1 = arith.constant 0 : i32
    return %c0_i32, %c0_i32_0 : i32, i32
  }
  func.func @transform_3(%arg0: i32) -> (i32, i32) {
    %c0_i32 = arith.constant 0 : i32
    %c0_i32_0 = arith.constant 0 : i32
    %c0_i32_1 = arith.constant 0 : i32
    return %c0_i32, %c0_i32_0 : i32, i32
  }
  func.func @transform_4(%arg0: i32) -> (i32, i32) {
    %c0_i32 = arith.constant 0 : i32
    %c0_i32_0 = arith.constant 0 : i32
    %c0_i32_1 = arith.constant 0 : i32
    return %c0_i32, %c0_i32_0 : i32, i32
  }
  func.func @transform_5(%arg0: i32) -> (i32, i32) {
    %c0_i32 = arith.constant 0 : i32
    %c0_i32_0 = arith.constant 0 : i32
    %c0_i32_1 = arith.constant 0 : i32
    return %c0_i32, %c0_i32_0 : i32, i32
  }
  func.func @transform_6(%arg0: i32) -> (i32, i32) {
    %c0_i32 = arith.constant 0 : i32
    %c0_i32_0 = arith.constant 0 : i32
    %c0_i32_1 = arith.constant 0 : i32
    return %c0_i32, %c0_i32_0 : i32, i32
  }
  func.func @transform_7(%arg0: i32) -> (i32, i32) {
    %c0_i32 = arith.constant 0 : i32
    %c0_i32_0 = arith.constant 0 : i32
    %c0_i32_1 = arith.constant 0 : i32
    return %c0_i32, %c0_i32_0 : i32, i32
  }
  func.func @transform_8(%arg0: i32) -> (i32, i32) {
    %c0_i32 = arith.constant 0 : i32
    %c0_i32_0 = arith.constant 0 : i32
    %c0_i32_1 = arith.constant 0 : i32
    return %c0_i32, %c0_i32_0 : i32, i32
  }
  func.func @transform_9(%arg0: i32) -> (i32, i32) {
    %c0_i32 = arith.constant 0 : i32
    %c0_i32_0 = arith.constant 0 : i32
    %c0_i32_1 = arith.constant 0 : i32
    return %c0_i32, %c0_i32_0 : i32, i32
  }
  func.func @transform_10(%arg0: i32) -> (i32, i32, i32) {
    %c0_i32 = arith.constant 0 : i32
    %c0_i32_0 = arith.constant 0 : i32
    %c0_i32_1 = arith.constant 0 : i32
    return %arg0, %c0_i32, %c0_i32_0 : i32, i32, i32
  }
  func.func @transform_11(%arg0: i32) -> (i32, i32, i32) {
    %c0_i32 = arith.constant 0 : i32
    %c0_i32_0 = arith.constant 0 : i32
    %c0_i32_1 = arith.constant 0 : i32
    return %arg0, %c0_i32, %c0_i32_0 : i32, i32, i32
  }
  func.func @transform_12(%arg0: i32) -> (i32, i32, i32) {
    %c0_i32 = arith.constant 0 : i32
    %c0_i32_0 = arith.constant 0 : i32
    %c0_i32_1 = arith.constant 0 : i32
    return %arg0, %c0_i32, %c0_i32_0 : i32, i32, i32
  }
}

</mosaic_0001>

<llo_original>
// kernel: tpu_custom_call.1
$region0: #{tpu_custom_call.1}
  #allocation0 [shape = 'u32[]', space=smem, size = 0x4, offset = 0x4, fixed_abs, tag = 'smem constant byte address 0x4 - core index']
  #allocation1 [shape = 'u32[144,128]{1,0:T(1,128)}', space=vmem, size = 0x12000, scoped, tag = 'internal scratch']
  %s0 = inlined_call_operand.hbm [shape: f32[4,128,128], index: 0, kind: input, shape index: {}]
  %s1 = inlined_call_operand.hbm [shape: f32[4,128,128], index: 1, kind: input, shape index: {}]
  %s2 = inlined_call_operand.hbm [shape: f32[128,128], index: 2, kind: input, shape index: {}]
  %s3 = inlined_call_operand.vmem [shape: f32[1,128], index: 3, kind: input, shape index: {}]
  %s4 = inlined_call_operand.hbm [shape: f32[128,256], index: 4, kind: input, shape index: {}]
  %s5 = inlined_call_operand.vmem [shape: f32[1,256], index: 5, kind: input, shape index: {}]
  %s6 = inlined_call_operand.hbm [shape: f32[128,128], index: 6, kind: input, shape index: {}]
  %s7 = inlined_call_operand.vmem [shape: f32[1,128], index: 7, kind: input, shape index: {}]
  %s8 = inlined_call_operand.hbm [shape: f32[128,128], index: 8, kind: input, shape index: {}]
  %s9 = inlined_call_operand.vmem [shape: f32[1,128], index: 9, kind: input, shape index: {}]
  %s10 = inlined_call_operand.hbm [shape: f32[4,128,128], index: 10, kind: input, shape index: {}]
  %s11 = inlined_call_operand.hbm [shape: f32[4,128,128], index: 11, kind: output, shape index: {0}]
  %s12 = inlined_call_operand.hbm [shape: f32[4,128,256], index: 12, kind: output, shape index: {1}]
  %13 = xla_tuple %s11, %s12
  %s14 = sld [smem:[#allocation0]]
  $region113: #{tpu_custom_call.1} parent=0
    _
  %s16 = ssub.s32 1, %s14
  %s17 = scalar_select 0, %s16, %s14
  $region1: #{tpu_custom_call.1} parent=0
    #allocation2 [shape = 'u8[131072]{0}', space=vmem, size = 0x20000, scoped, tag = 'input window, operand 0']
    #allocation3 [shape = 's32[2]{0}', space=sflag, size = 0x8, scoped, tag = 'scoped memory for tpu_custom_call.1']
    #allocation4 [shape = 's32[2]{0}', space=sflag, size = 0x8, scoped, tag = 'scoped memory for tpu_custom_call.1']
    #allocation5 [shape = 'u8[131072]{0}', space=vmem, size = 0x20000, scoped, tag = 'input window, operand 1']
    #allocation6 [shape = 's32[2]{0}', space=sflag, size = 0x8, scoped, tag = 'scoped memory for tpu_custom_call.1']
    #allocation7 [shape = 'u8[65536]{0}', space=vmem, size = 0x10000, scoped, tag = 'input window, operand 2, single buffered']
    #allocation8 [shape = 'u8[131072]{0}', space=vmem, size = 0x20000, scoped, tag = 'input window, operand 4, single buffered']
    #allocation9 [shape = 's32[1]{0}', space=sflag, size = 0x4, scoped, tag = 'scoped memory for tpu_custom_call.1']
    #allocation10 [shape = 'u8[65536]{0}', space=vmem, size = 0x10000, scoped, tag = 'input window, operand 6, single buffered']
    #allocation11 [shape = 'u8[65536]{0}', space=vmem, size = 0x10000, scoped, tag = 'input window, operand 8, single buffered']
    #allocation12 [shape = 's32[1]{0}', space=sflag, size = 0x4, scoped, tag = 'scoped memory for tpu_custom_call.1']
    #allocation13 [shape = 'u8[131072]{0}', space=vmem, size = 0x20000, scoped, tag = 'input window, operand 10']
    #allocation14 [shape = 'u8[131072]{0}', space=vmem, size = 0x20000, scoped, tag = 'output window, operand 0']
    #allocation15 [shape = 'u8[262144]{0}', space=vmem, size = 0x40000, scoped, tag = 'output window, operand 1']
    #allocation16 [shape = 's32[2]{0}', space=sflag, size = 0x8, scoped, tag = 'scoped memory for tpu_custom_call.1']
    %18 = vsyncpa [#allocation3], 0
    %s19 = scalar_lea.sflag [#allocation3], 1
    %20 = vsyncpa %s19, 0
    %21 = vsyncpa [#allocation6], 0
    %s22 = scalar_lea.sflag [#allocation6], 1
    %23 = vsyncpa %s22, 0
    %24 = vsyncpa [#allocation9], 0
    %25 = vsyncpa [#allocation12], 0
    %26 = vsyncpa [#allocation4], 0
    %s27 = scalar_lea.sflag [#allocation4], 1
    %28 = vsyncpa %s27, 0
    %29 = vsyncpa [#allocation16], 0
    %s30 = scalar_lea.sflag [#allocation16], 1
    %31 = vsyncpa %s30, 0
    loop: start=0, step=1, limit=6
    $region2: #{tpu_custom_call.1} parent=1 // loop_pre_header
      _
    $region3: #{tpu_custom_call.1} parent=1 // loop_header
      %s33 = sphi 0, %s37
      %p34 = scmp.ge.s32.totalorder %s33, 6
      %s43 = sphi 0, %s45
      %s46 = sphi 0, %s43
      %s47 = sphi 0, %s46
      %s63 = sphi 0, %s47
      %s69 = sphi 0, %s71
      %s72 = sphi 0, %s69
      %s73 = sphi 0, %s72
      %s89 = sphi 0, %s73
      %s93 = sphi 0, %s93
      %s95 = sphi 0, %s93
      %s96 = sphi 0, %s95
      %s110 = sphi 0, %s96
      %s114 = sphi 0, %s114
      %s116 = sphi 0, %s114
      %s117 = sphi 0, %s116
      %s131 = sphi 0, %s117
      %s135 = sphi 0, %s135
      %s137 = sphi 0, %s135
      %s138 = sphi 0, %s137
      %s152 = sphi 0, %s138
      %s156 = sphi 0, %s156
      %s158 = sphi 0, %s156
      %s159 = sphi 0, %s158
      %s173 = sphi 0, %s159
      %s177 = sphi 0, %s177
      %s179 = sphi 0, %s177
      %s180 = sphi 0, %s179
      %s194 = sphi 0, %s180
      %s198 = sphi 0, %s198
      %s200 = sphi 0, %s198
      %s201 = sphi 0, %s200
      %s215 = sphi 0, %s201
      %s219 = sphi 0, %s219
      %s221 = sphi 0, %s219
      %s222 = sphi 0, %s221
      %s236 = sphi 0, %s222
      %s240 = sphi 0, %s240
      %s242 = sphi 0, %s240
      %s243 = sphi 0, %s242
      %s257 = sphi 0, %s243
      %s263 = sphi 0, %s265
      %s266 = sphi 0, %s263
      %s267 = sphi 0, %s266
      %s283 = sphi 0, %s267
      %s289 = sphi 0, %s291
      %s292 = sphi 0, %s289
      %s293 = sphi 0, %s292
      %s309 = sphi 0, %s293
      %s315 = sphi 0, %s317
      %s318 = sphi 0, %s315
      %s319 = sphi 0, %s318
      %s335 = sphi 0, %s319
    $region4: #{tpu_custom_call.1} parent=1 // loop_header_branch
      %36 = sbr.rel (%p34) target = $region8
    $region5: #{tpu_custom_call.1} parent=1 // loop_body
      %s38 = ssub.s32 %s33, 1
      %s39 = ssub.s32 %s33, 2
      %s40 = sadd.s32 %s33, 1
      %s41 = ssub.s32 %s33, %s40
      %p42 = scmp.eq.s32.totalorder %s41, 0
      %s44 = sadd.s32 %s43, 1
      %s45 = scalar_select %p42, %s43, %s44
      %p48 = pneg %p42
      %p49 = scmp.eq.s32.totalorder %s33, 3
      %p50 = por %p48, %p49
      %p51 = scmp.ne.s32.totalorder %s43, %s46
      %p52 = scmp.eq.s32.totalorder %s33, 0
      %p53 = por %p51, %p52
      %p54 = scmp.ne.s32.totalorder %s43, %s46
      %p55 = scmp.eq.s32.totalorder %s38, 3
      %p56 = por %p54, %p55
      %p57 = scmp.ne.s32.totalorder %s46, %s47
      %p58 = scmp.eq.s32.totalorder %s38, 0
      %p59 = por %p57, %p58
      %p60 = scmp.ne.s32.totalorder %s46, %s47
      %p61 = scmp.eq.s32.totalorder %s39, 3
      %p62 = por %p60, %p61
      %p64 = scmp.ne.s32.totalorder %s47, %s63
      %p65 = scmp.eq.s32.totalorder %s39, 0
      %p66 = por %p64, %p65
      %s67 = ssub.s32 %s33, %s40
      %p68 = scmp.eq.s32.totalorder %s67, 0
      %s70 = sadd.s32 %s69, 1
      %s71 = scalar_select %p68, %s69, %s70
      %p74 = pneg %p68
      %p75 = scmp.eq.s32.totalorder %s33, 3
      %p76 = por %p74, %p75
      %p77 = scmp.ne.s32.totalorder %s69, %s72
      %p78 = scmp.eq.s32.totalorder %s33, 0
      %p79 = por %p77, %p78
      %p80 = scmp.ne.s32.totalorder %s69, %s72
      %p81 = scmp.eq.s32.totalorder %s38, 3
      %p82 = por %p80, %p81
      %p83 = scmp.ne.s32.totalorder %s72, %s73
      %p84 = scmp.eq.s32.totalorder %s38, 0
      %p85 = por %p83, %p84
      %p86 = scmp.ne.s32.totalorder %s72, %s73
      %p87 = scmp.eq.s32.totalorder %s39, 3
      %p88 = por %p86, %p87
      %p90 = scmp.ne.s32.totalorder %s73, %s89
      %p91 = scmp.eq.s32.totalorder %s39, 0
      %p92 = por %p90, %p91
      %s94 = sadd.s32 %s93, 1
      %p97 = scmp.eq.s32.totalorder %s33, 3
      %p98 = scmp.ne.s32.totalorder %s93, %s95
      %p99 = scmp.eq.s32.totalorder %s33, 0
      %p100 = por %p98, %p99
      %p101 = scmp.ne.s32.totalorder %s93, %s95
      %p102 = scmp.eq.s32.totalorder %s38, 3
      %p103 = por %p101, %p102
      %p104 = scmp.ne.s32.totalorder %s95, %s96
      %p105 = scmp.eq.s32.totalorder %s38, 0
      %p106 = por %p104, %p105
      %p107 = scmp.ne.s32.totalorder %s95, %s96
      %p108 = scmp.eq.s32.totalorder %s39, 3
      %p109 = por %p107, %p108
      %p111 = scmp.ne.s32.totalorder %s96, %s110
      %p112 = scmp.eq.s32.totalorder %s39, 0
      %p113 = por %p111, %p112
      %s115 = sadd.s32 %s114, 1
      %p118 = scmp.eq.s32.totalorder %s33, 3
      %p119 = scmp.ne.s32.totalorder %s114, %s116
      %p120 = scmp.eq.s32.totalorder %s33, 0
      %p121 = por %p119, %p120
      %p122 = scmp.ne.s32.totalorder %s114, %s116
      %p123 = scmp.eq.s32.totalorder %s38, 3
      %p124 = por %p122, %p123
      %p125 = scmp.ne.s32.totalorder %s116, %s117
      %p126 = scmp.eq.s32.totalorder %s38, 0
      %p127 = por %p125, %p126
      %p128 = scmp.ne.s32.totalorder %s116, %s117
      %p129 = scmp.eq.s32.totalorder %s39, 3
      %p130 = por %p128, %p129
      %p132 = scmp.ne.s32.totalorder %s117, %s131
      %p133 = scmp.eq.s32.totalorder %s39, 0
      %p134 = por %p132, %p133
      %s136 = sadd.s32 %s135, 1
      %p139 = scmp.eq.s32.totalorder %s33, 3
      %p140 = scmp.ne.s32.totalorder %s135, %s137
      %p141 = scmp.eq.s32.totalorder %s33, 0
      %p142 = por %p140, %p141
      %p143 = scmp.ne.s32.totalorder %s135, %s137
      %p144 = scmp.eq.s32.totalorder %s38, 3
      %p145 = por %p143, %p144
      %p146 = scmp.ne.s32.totalorder %s137, %s138
      %p147 = scmp.eq.s32.totalorder %s38, 0
      %p148 = por %p146, %p147
      %p149 = scmp.ne.s32.totalorder %s137, %s138
      %p150 = scmp.eq.s32.totalorder %s39, 3
      %p151 = por %p149, %p150
      %p153 = scmp.ne.s32.totalorder %s138, %s152
      %p154 = scmp.eq.s32.totalorder %s39, 0
      %p155 = por %p153, %p154
      %s157 = sadd.s32 %s156, 1
      %p160 = scmp.eq.s32.totalorder %s33, 3
      %p161 = scmp.ne.s32.totalorder %s156, %s158
      %p162 = scmp.eq.s32.totalorder %s33, 0
      %p163 = por %p161, %p162
      %p164 = scmp.ne.s32.totalorder %s156, %s158
      %p165 = scmp.eq.s32.totalorder %s38, 3
      %p166 = por %p164, %p165
      %p167 = scmp.ne.s32.totalorder %s158, %s159
      %p168 = scmp.eq.s32.totalorder %s38, 0
      %p169 = por %p167, %p168
      %p170 = scmp.ne.s32.totalorder %s158, %s159
      %p171 = scmp.eq.s32.totalorder %s39, 3
      %p172 = por %p170, %p171
      %p174 = scmp.ne.s32.totalorder %s159, %s173
      %p175 = scmp.eq.s32.totalorder %s39, 0
      %p176 = por %p174, %p175
      %s178 = sadd.s32 %s177, 1
      %p181 = scmp.eq.s32.totalorder %s33, 3
      %p182 = scmp.ne.s32.totalorder %s177, %s179
      %p183 = scmp.eq.s32.totalorder %s33, 0
      %p184 = por %p182, %p183
      %p185 = scmp.ne.s32.totalorder %s177, %s179
      %p186 = scmp.eq.s32.totalorder %s38, 3
      %p187 = por %p185, %p186
      %p188 = scmp.ne.s32.totalorder %s179, %s180
      %p189 = scmp.eq.s32.totalorder %s38, 0
      %p190 = por %p188, %p189
      %p191 = scmp.ne.s32.totalorder %s179, %s180
      %p192 = scmp.eq.s32.totalorder %s39, 3
      %p193 = por %p191, %p192
      %p195 = scmp.ne.s32.totalorder %s180, %s194
      %p196 = scmp.eq.s32.totalorder %s39, 0
      %p197 = por %p195, %p196
      %s199 = sadd.s32 %s198, 1
      %p202 = scmp.eq.s32.totalorder %s33, 3
      %p203 = scmp.ne.s32.totalorder %s198, %s200
      %p204 = scmp.eq.s32.totalorder %s33, 0
      %p205 = por %p203, %p204
      %p206 = scmp.ne.s32.totalorder %s198, %s200
      %p207 = scmp.eq.s32.totalorder %s38, 3
      %p208 = por %p206, %p207
      %p209 = scmp.ne.s32.totalorder %s200, %s201
      %p210 = scmp.eq.s32.totalorder %s38, 0
      %p211 = por %p209, %p210
      %p212 = scmp.ne.s32.totalorder %s200, %s201
      %p213 = scmp.eq.s32.totalorder %s39, 3
      %p214 = por %p212, %p213
      %p216 = scmp.ne.s32.totalorder %s201, %s215
      %p217 = scmp.eq.s32.totalorder %s39, 0
      %p218 = por %p216, %p217
      %s220 = sadd.s32 %s219, 1
      %p223 = scmp.eq.s32.totalorder %s33, 3
      %p224 = scmp.ne.s32.totalorder %s219, %s221
      %p225 = scmp.eq.s32.totalorder %s33, 0
      %p226 = por %p224, %p225
      %p227 = scmp.ne.s32.totalorder %s219, %s221
      %p228 = scmp.eq.s32.totalorder %s38, 3
      %p229 = por %p227, %p228
      %p230 = scmp.ne.s32.totalorder %s221, %s222
      %p231 = scmp.eq.s32.totalorder %s38, 0
      %p232 = por %p230, %p231
      %p233 = scmp.ne.s32.totalorder %s221, %s222
      %p234 = scmp.eq.s32.totalorder %s39, 3
      %p235 = por %p233, %p234
      %p237 = scmp.ne.s32.totalorder %s222, %s236
      %p238 = scmp.eq.s32.totalorder %s39, 0
      %p239 = por %p237, %p238
      %s241 = sadd.s32 %s240, 1
      %p244 = scmp.eq.s32.totalorder %s33, 3
      %p245 = scmp.ne.s32.totalorder %s240, %s242
      %p246 = scmp.eq.s32.totalorder %s33, 0
      %p247 = por %p245, %p246
      %p248 = scmp.ne.s32.totalorder %s240, %s242
      %p249 = scmp.eq.s32.totalorder %s38, 3
      %p250 = por %p248, %p249
      %p251 = scmp.ne.s32.totalorder %s242, %s243
      %p252 = scmp.eq.s32.totalorder %s38, 0
      %p253 = por %p251, %p252
      %p254 = scmp.ne.s32.totalorder %s242, %s243
      %p255 = scmp.eq.s32.totalorder %s39, 3
      %p256 = por %p254, %p255
      %p258 = scmp.ne.s32.totalorder %s243, %s257
      %p259 = scmp.eq.s32.totalorder %s39, 0
      %p260 = por %p258, %p259
      %s261 = ssub.s32 %s33, %s40
      %p262 = scmp.eq.s32.totalorder %s261, 0
      %s264 = sadd.s32 %s263, 1
      %s265 = scalar_select %p262, %s263, %s264
      %p268 = pneg %p262
      %p269 = scmp.eq.s32.totalorder %s33, 3
      %p270 = por %p268, %p269
      %p271 = scmp.ne.s32.totalorder %s263, %s266
      %p272 = scmp.eq.s32.totalorder %s33, 0
      %p273 = por %p271, %p272
      %p274 = scmp.ne.s32.totalorder %s263, %s266
      %p275 = scmp.eq.s32.totalorder %s38, 3
      %p276 = por %p274, %p275
      %p277 = scmp.ne.s32.totalorder %s266, %s267
      %p278 = scmp.eq.s32.totalorder %s38, 0
      %p279 = por %p277, %p278
      %p280 = scmp.ne.s32.totalorder %s266, %s267
      %p281 = scmp.eq.s32.totalorder %s39, 3
      %p282 = por %p280, %p281
      %p284 = scmp.ne.s32.totalorder %s267, %s283
      %p285 = scmp.eq.s32.totalorder %s39, 0
      %p286 = por %p284, %p285
      %s287 = ssub.s32 %s33, %s40
      %p288 = scmp.eq.s32.totalorder %s287, 0
      %s290 = sadd.s32 %s289, 1
      %s291 = scalar_select %p288, %s289, %s290
      %p294 = pneg %p288
      %p295 = scmp.eq.s32.totalorder %s33, 3
      %p296 = por %p294, %p295
      %p297 = scmp.ne.s32.totalorder %s289, %s292
      %p298 = scmp.eq.s32.totalorder %s33, 0
      %p299 = por %p297, %p298
      %p300 = scmp.ne.s32.totalorder %s289, %s292
      %p301 = scmp.eq.s32.totalorder %s38, 3
      %p302 = por %p300, %p301
      %p303 = scmp.ne.s32.totalorder %s292, %s293
      %p304 = scmp.eq.s32.totalorder %s38, 0
      %p305 = por %p303, %p304
      %p306 = scmp.ne.s32.totalorder %s292, %s293
      %p307 = scmp.eq.s32.totalorder %s39, 3
      %p308 = por %p306, %p307
      %p310 = scmp.ne.s32.totalorder %s293, %s309
      %p311 = scmp.eq.s32.totalorder %s39, 0
      %p312 = por %p310, %p311
      %s313 = ssub.s32 %s33, %s40
      %p314 = scmp.eq.s32.totalorder %s313, 0
      %s316 = sadd.s32 %s315, 1
      %s317 = scalar_select %p314, %s315, %s316
      %p320 = pneg %p314
      %p321 = scmp.eq.s32.totalorder %s33, 3
      %p322 = por %p320, %p321
      %p323 = scmp.ne.s32.totalorder %s315, %s318
      %p324 = scmp.eq.s32.totalorder %s33, 0
      %p325 = por %p323, %p324
      %p326 = scmp.ne.s32.totalorder %s315, %s318
      %p327 = scmp.eq.s32.totalorder %s38, 3
      %p328 = por %p326, %p327
      %p329 = scmp.ne.s32.totalorder %s318, %s319
      %p330 = scmp.eq.s32.totalorder %s38, 0
      %p331 = por %p329, %p330
      %p332 = scmp.ne.s32.totalorder %s318, %s319
      %p333 = scmp.eq.s32.totalorder %s39, 3
      %p334 = por %p332, %p333
      %p336 = scmp.ne.s32.totalorder %s319, %s335
      %p337 = scmp.eq.s32.totalorder %s39, 0
      %p338 = por %p336, %p337
      %p339 = scmp.le.s32.totalorder 1, %s33
      %p340 = scmp.lt.s32.totalorder %s33, 5
      %p341 = pnand %p339, %p340
      %p342 = pneg %p341
      // Predicated region
      $region9: #{tpu_custom_call.1} parent=5 // pred_check
        _
      $region10: #{tpu_custom_call.1} parent=5 // pred_check_branch
        %344 = sbr.rel (%p341) target = $region12
      $region11: #{tpu_custom_call.1} parent=5 // pred_region
        %s345 = ssub.s32 %s33, 1
        // Predicated region
        $region13: #{tpu_custom_call.1} parent=11 // pred_check
          %p346 = pneg %p106
        $region14: #{tpu_custom_call.1} parent=11 // pred_check_branch
          %348 = sbr.rel (%p346) target = $region16
        $region15: #{tpu_custom_call.1} parent=11 // pred_region
          %s350 = ssub.s32 2048, 2048
          %351 = vsyncadd [#allocation6], %s350
          %s352 = sshll.u32 [#allocation7], 4
          %s353 = int_to_ptr.vmem [resolvable:$true] %s352
          %358 = dma.hbm_to_vmem [thread:$0]  %s2, 2048, %s353, [#allocation6], 128, 128, 8
        $region16: #{tpu_custom_call.1} parent=11 // pred_fallthru
          _
        // Predicated region
        $region17: #{tpu_custom_call.1} parent=11 // pred_check
          %p359 = pneg %p127
        $region18: #{tpu_custom_call.1} parent=11 // pred_check_branch
          %361 = sbr.rel (%p359) target = $region20
        $region19: #{tpu_custom_call.1} parent=11 // pred_region
          _
        $region20: #{tpu_custom_call.1} parent=11 // pred_fallthru
          _
        // Predicated region
        $region21: #{tpu_custom_call.1} parent=11 // pred_check
          %p362 = pneg %p148
        $region22: #{tpu_custom_call.1} parent=11 // pred_check_branch
          %364 = sbr.rel (%p362) target = $region24
        $region23: #{tpu_custom_call.1} parent=11 // pred_region
          %s366 = ssub.s32 4096, 4096
          %367 = vsyncadd [#allocation9], %s366
          %s368 = sshll.u32 [#allocation8], 4
          %s369 = int_to_ptr.vmem [resolvable:$true] %s368
          %374 = dma.hbm_to_vmem [thread:$0]  %s4, 4096, %s369, [#allocation9], 256, 256, 16
        $region24: #{tpu_custom_call.1} parent=11 // pred_fallthru
          _
        // Predicated region
        $region25: #{tpu_custom_call.1} parent=11 // pred_check
          %p375 = pneg %p169
        $region26: #{tpu_custom_call.1} parent=11 // pred_check_branch
          %377 = sbr.rel (%p375) target = $region28
        $region27: #{tpu_custom_call.1} parent=11 // pred_region
          _
        $region28: #{tpu_custom_call.1} parent=11 // pred_fallthru
          _
        // Predicated region
        $region29: #{tpu_custom_call.1} parent=11 // pred_check
          %p378 = pneg %p190
        $region30: #{tpu_custom_call.1} parent=11 // pred_check_branch
          %380 = sbr.rel (%p378) target = $region32
        $region31: #{tpu_custom_call.1} parent=11 // pred_region
          %s382 = ssub.s32 2048, 2048
          %383 = vsyncadd [#allocation9], %s382
          %s384 = sshll.u32 [#allocation10], 4
          %s385 = int_to_ptr.vmem [resolvable:$true] %s384
          %390 = dma.hbm_to_vmem [thread:$0]  %s6, 2048, %s385, [#allocation9], 128, 128, 8
        $region32: #{tpu_custom_call.1} parent=11 // pred_fallthru
          _
        // Predicated region
        $region33: #{tpu_custom_call.1} parent=11 // pred_check
          %p391 = pneg %p211
        $region34: #{tpu_custom_call.1} parent=11 // pred_check_branch
          %393 = sbr.rel (%p391) target = $region36
        $region35: #{tpu_custom_call.1} parent=11 // pred_region
          _
        $region36: #{tpu_custom_call.1} parent=11 // pred_fallthru
          _
        // Predicated region
        $region37: #{tpu_custom_call.1} parent=11 // pred_check
          %p394 = pneg %p232
        $region38: #{tpu_custom_call.1} parent=11 // pred_check_branch
          %396 = sbr.rel (%p394) target = $region40
        $region39: #{tpu_custom_call.1} parent=11 // pred_region
          %s398 = ssub.s32 2048, 2048
          %399 = vsyncadd [#allocation12], %s398
          %s400 = sshll.u32 [#allocation11], 4
          %s401 = int_to_ptr.vmem [resolvable:$true] %s400
          %406 = dma.hbm_to_vmem [thread:$0]  %s8, 2048, %s401, [#allocation12], 128, 128, 8
        $region40: #{tpu_custom_call.1} parent=11 // pred_fallthru
          _
        // Predicated region
        $region41: #{tpu_custom_call.1} parent=11 // pred_check
          %p407 = pneg %p253
        $region42: #{tpu_custom_call.1} parent=11 // pred_check_branch
          %409 = sbr.rel (%p407) target = $region44
        $region43: #{tpu_custom_call.1} parent=11 // pred_region
          _
        $region44: #{tpu_custom_call.1} parent=11 // pred_fallthru
          _
      $region12: #{tpu_custom_call.1} parent=5 // pred_fallthru
        _
      %p410 = scmp.lt.s32.totalorder %s33, 4
      // Predicated region
      $region45: #{tpu_custom_call.1} parent=5 // pred_check
        %p411 = pneg %p410
      $region46: #{tpu_custom_call.1} parent=5 // pred_check_branch
        %413 = sbr.rel (%p411) target = $region48
      $region47: #{tpu_custom_call.1} parent=5 // pred_region
        // Predicated region
        $region49: #{tpu_custom_call.1} parent=47 // pred_check
          %p414 = pneg %p53
        $region50: #{tpu_custom_call.1} parent=47 // pred_check_branch
          %416 = sbr.rel (%p414) target = $region52
        $region51: #{tpu_custom_call.1} parent=47 // pred_region
          %s417 = sand.u32 %s33, 1
          %s418 = scalar_lea.sflag [#allocation3], %s417
          %s419 = sand.u32 %s43, 1
          %s420 = smul.addr %s419, 128
          %s421 = scalar_lea.vmem [#allocation2], %s420
          %s423 = ssub.s32 2048, 2048
          %424 = vsyncadd %s418, %s423
          %s425 = smul.addr %s33, 16
          %s426 = smul.addr %s425, 128
          %s427 = scalar_lea.hbm %s0, %s426
          %s428 = sshll.u32 %s421, 4
          %s429 = int_to_ptr.vmem [resolvable:$true] %s428
          %434 = dma.hbm_to_vmem [thread:$0]  %s427, 2048, %s429, %s418, 128, 128, 8
        $region52: #{tpu_custom_call.1} parent=47 // pred_fallthru
          _
        // Predicated region
        $region53: #{tpu_custom_call.1} parent=47 // pred_check
          %p435 = pneg %p79
        $region54: #{tpu_custom_call.1} parent=47 // pred_check_branch
          %437 = sbr.rel (%p435) target = $region56
        $region55: #{tpu_custom_call.1} parent=47 // pred_region
          %s438 = sand.u32 %s33, 1
          %s439 = scalar_lea.sflag [#allocation6], %s438
          %s440 = sand.u32 %s69, 1
          %s441 = smul.addr %s440, 128
          %s442 = scalar_lea.vmem [#allocation5], %s441
          %s444 = ssub.s32 2048, 2048
          %445 = vsyncadd %s439, %s444
          %s446 = smul.addr %s33, 16
          %s447 = smul.addr %s446, 128
          %s448 = scalar_lea.hbm %s1, %s447
          %s449 = sshll.u32 %s442, 4
          %s450 = int_to_ptr.vmem [resolvable:$true] %s449
          %455 = dma.hbm_to_vmem [thread:$0]  %s448, 2048, %s450, %s439, 128, 128, 8
        $region56: #{tpu_custom_call.1} parent=47 // pred_fallthru
          _
        // Predicated region
        $region57: #{tpu_custom_call.1} parent=47 // pred_check
          %p456 = pneg %p273
        $region58: #{tpu_custom_call.1} parent=47 // pred_check_branch
          %458 = sbr.rel (%p456) target = $region60
        $region59: #{tpu_custom_call.1} parent=47 // pred_region
          %s459 = sand.u32 %s33, 1
          %s460 = scalar_lea.sflag [#allocation3], %s459
          %s461 = sand.u32 %s263, 1
          %s462 = smul.addr %s461, 128
          %s463 = scalar_lea.vmem [#allocation13], %s462
          %s465 = ssub.s32 2048, 2048
          %466 = vsyncadd %s460, %s465
          %s467 = smul.addr %s33, 16
          %s468 = smul.addr %s467, 128
          %s469 = scalar_lea.hbm %s10, %s468
          %s470 = sshll.u32 %s463, 4
          %s471 = int_to_ptr.vmem [resolvable:$true] %s470
          %476 = dma.hbm_to_vmem [thread:$0]  %s469, 2048, %s471, %s460, 128, 128, 8
        $region60: #{tpu_custom_call.1} parent=47 // pred_fallthru
          _
      $region48: #{tpu_custom_call.1} parent=5 // pred_fallthru
        _
      %p477 = scmp.le.s32.totalorder 1, %s33
      %p478 = scmp.lt.s32.totalorder %s33, 5
      %p479 = pnand %p477, %p478
      %p480 = pneg %p479
      // Predicated region
      $region61: #{tpu_custom_call.1} parent=5 // pred_check
        _
      $region62: #{tpu_custom_call.1} parent=5 // pred_check_branch
        %482 = sbr.rel (%p479) target = $region64
      $region63: #{tpu_custom_call.1} parent=5 // pred_region
        %s483 = ssub.s32 %s33, 1
        %s484 = sand.u32 %s38, 1
        %s485 = scalar_lea.sflag [#allocation3], %s484
        %s486 = sand.u32 %s46, 1
        %s487 = smul.addr %s486, 128
        %s488 = scalar_lea.vmem [#allocation2], %s487
        // Predicated region
        $region65: #{tpu_custom_call.1} parent=63 // pred_check
          %p489 = pneg %p59
        $region66: #{tpu_custom_call.1} parent=63 // pred_check_branch
          %491 = sbr.rel (%p489) target = $region68
        $region67: #{tpu_custom_call.1} parent=63 // pred_region
          %492 = dma.done %s485, 2048
        $region68: #{tpu_custom_call.1} parent=63 // pred_fallthru
          _
        %s493 = sand.u32 %s38, 1
        %s494 = scalar_lea.sflag [#allocation6], %s493
        %s495 = sand.u32 %s72, 1
        %s496 = smul.addr %s495, 128
        %s497 = scalar_lea.vmem [#allocation5], %s496
        // Predicated region
        $region69: #{tpu_custom_call.1} parent=63 // pred_check
          %p498 = pneg %p85
        $region70: #{tpu_custom_call.1} parent=63 // pred_check_branch
          %500 = sbr.rel (%p498) target = $region72
        $region71: #{tpu_custom_call.1} parent=63 // pred_region
          %501 = dma.done %s494, 2048
        $region72: #{tpu_custom_call.1} parent=63 // pred_fallthru
          _
        // Predicated region
        $region73: #{tpu_custom_call.1} parent=63 // pred_check
          %p502 = pneg %p106
        $region74: #{tpu_custom_call.1} parent=63 // pred_check_branch
          %504 = sbr.rel (%p502) target = $region76
        $region75: #{tpu_custom_call.1} parent=63 // pred_region
          %505 = dma.done [#allocation6], 2048
        $region76: #{tpu_custom_call.1} parent=63 // pred_fallthru
          _
        // Predicated region
        $region77: #{tpu_custom_call.1} parent=63 // pred_check
          %p506 = pneg %p148
        $region78: #{tpu_custom_call.1} parent=63 // pred_check_branch
          %508 = sbr.rel (%p506) target = $region80
        $region79: #{tpu_custom_call.1} parent=63 // pred_region
          %509 = dma.done [#allocation9], 4096
        $region80: #{tpu_custom_call.1} parent=63 // pred_fallthru
          _
        // Predicated region
        $region81: #{tpu_custom_call.1} parent=63 // pred_check
          %p510 = pneg %p190
        $region82: #{tpu_custom_call.1} parent=63 // pred_check_branch
          %512 = sbr.rel (%p510) target = $region84
        $region83: #{tpu_custom_call.1} parent=63 // pred_region
          %513 = dma.done [#allocation9], 2048
        $region84: #{tpu_custom_call.1} parent=63 // pred_fallthru
          _
        // Predicated region
        $region85: #{tpu_custom_call.1} parent=63 // pred_check
          %p514 = pneg %p232
        $region86: #{tpu_custom_call.1} parent=63 // pred_check_branch
          %516 = sbr.rel (%p514) target = $region88
        $region87: #{tpu_custom_call.1} parent=63 // pred_region
          %517 = dma.done [#allocation12], 2048
        $region88: #{tpu_custom_call.1} parent=63 // pred_fallthru
          _
        %s518 = sand.u32 %s38, 1
        %s519 = scalar_lea.sflag [#allocation3], %s518
        %s520 = sand.u32 %s266, 1
        %s521 = smul.addr %s520, 128
        %s522 = scalar_lea.vmem [#allocation13], %s521
        // Predicated region
        $region89: #{tpu_custom_call.1} parent=63 // pred_check
          %p523 = pneg %p279
        $region90: #{tpu_custom_call.1} parent=63 // pred_check_branch
          %525 = sbr.rel (%p523) target = $region92
        $region91: #{tpu_custom_call.1} parent=63 // pred_region
          %526 = dma.done %s519, 2048
        $region92: #{tpu_custom_call.1} parent=63 // pred_fallthru
          _
        %s527 = sand.u32 %s38, 1
        %s528 = scalar_lea.sflag [#allocation3], %s527
        %s529 = sand.u32 %s46, 1
        %s530 = smul.addr %s529, 128
        %s531 = scalar_lea.vmem [#allocation2], %s530
        %p532 = pneg %p59
        %p533 = pneg %p56
        %s534 = sand.u32 %s38, 1
        %s535 = scalar_lea.sflag [#allocation6], %s534
        %s536 = sand.u32 %s72, 1
        %s537 = smul.addr %s536, 128
        %s538 = scalar_lea.vmem [#allocation5], %s537
        %p539 = pneg %p85
        %p540 = pneg %p82
        %p541 = pneg %p106
        %p542 = pneg %p103
        %p543 = pneg %p127
        %p544 = pneg %p124
        %p545 = pneg %p148
        %p546 = pneg %p145
        %p547 = pneg %p169
        %p548 = pneg %p166
        %p549 = pneg %p190
        %p550 = pneg %p187
        %p551 = pneg %p211
        %p552 = pneg %p208
        %p553 = pneg %p232
        %p554 = pneg %p229
        %p555 = pneg %p253
        %p556 = pneg %p250
        %s557 = sand.u32 %s38, 1
        %s558 = scalar_lea.sflag [#allocation3], %s557
        %s559 = sand.u32 %s266, 1
        %s560 = smul.addr %s559, 128
        %s561 = scalar_lea.vmem [#allocation13], %s560
        %p562 = pneg %p279
        %p563 = pneg %p276
        %p564 = pneg %p305
        %p565 = pneg %p302
        %s566 = sand.u32 %s292, 1
        %s567 = scalar_lea.sflag [#allocation4], %s566
        %s568 = sand.u32 %s292, 1
        %s569 = smul.addr %s568, 128
        %s570 = scalar_lea.vmem [#allocation14], %s569
        %p571 = pneg %p331
        %p572 = pneg %p328
        %s573 = sand.u32 %s318, 1
        %s574 = scalar_lea.sflag [#allocation16], %s573
        %s575 = sand.u32 %s318, 1
        %s576 = smul.addr %s575, 256
        %s577 = scalar_lea.vmem [#allocation15], %s576
        %v578 = vld [vmem:[%s488] sm:$0xff]
        %v579 = vld [vmem:[%s488 + $0x8] sm:$0xff]
        %v580 = vld [vmem:[%s488 + $0x10] sm:$0xff]
        %v581 = vld [vmem:[%s488 + $0x18] sm:$0xff]
        %v582 = vld [vmem:[%s488 + $0x20] sm:$0xff]
        %v583 = vld [vmem:[%s488 + $0x28] sm:$0xff]
        %v584 = vld [vmem:[%s488 + $0x30] sm:$0xff]
        %v585 = vld [vmem:[%s488 + $0x38] sm:$0xff]
        %v586 = vld [vmem:[%s488 + $0x40] sm:$0xff]
        %v587 = vld [vmem:[%s488 + $0x48] sm:$0xff]
        %v588 = vld [vmem:[%s488 + $0x50] sm:$0xff]
        %v589 = vld [vmem:[%s488 + $0x58] sm:$0xff]
        %v590 = vld [vmem:[%s488 + $0x60] sm:$0xff]
        %v591 = vld [vmem:[%s488 + $0x68] sm:$0xff]
        %v592 = vld [vmem:[%s488 + $0x70] sm:$0xff]
        %v593 = vld [vmem:[%s488 + $0x78] sm:$0xff]
        %v594 = vld [vmem:[%s497] sm:$0xff]
        %v595 = vld [vmem:[%s497 + $0x8] sm:$0xff]
        %v596 = vld [vmem:[%s497 + $0x10] sm:$0xff]
        %v597 = vld [vmem:[%s497 + $0x18] sm:$0xff]
        %v598 = vld [vmem:[%s497 + $0x20] sm:$0xff]
        %v599 = vld [vmem:[%s497 + $0x28] sm:$0xff]
        %v600 = vld [vmem:[%s497 + $0x30] sm:$0xff]
        %v601 = vld [vmem:[%s497 + $0x38] sm:$0xff]
        %v602 = vld [vmem:[%s497 + $0x40] sm:$0xff]
        %v603 = vld [vmem:[%s497 + $0x48] sm:$0xff]
        %v604 = vld [vmem:[%s497 + $0x50] sm:$0xff]
        %v605 = vld [vmem:[%s497 + $0x58] sm:$0xff]
        %v606 = vld [vmem:[%s497 + $0x60] sm:$0xff]
        %v607 = vld [vmem:[%s497 + $0x68] sm:$0xff]
        %v608 = vld [vmem:[%s497 + $0x70] sm:$0xff]
        %v609 = vld [vmem:[%s497 + $0x78] sm:$0xff]
        %610 = vmatprep.subr.mxu0 0.0
        %611 = vmatpush1.msra.mxu0 %v609
        %612 = vmatprep.subr.mxu0 0.0
        %613 = vmatpush1.msra.mxu0 %v608
        %614 = vmatprep.subr.mxu0 0.0
        %615 = vmatpush1.msra.mxu0 %v607
        %616 = vmatprep.subr.mxu0 0.0
        %617 = vmatpush1.msra.mxu0 %v606
        %618 = vmatprep.subr.mxu0 0.0
        %619 = vmatpush1.msra.mxu0 %v605
        %620 = vmatprep.subr.mxu0 0.0
        %621 = vmatpush1.msra.mxu0 %v604
        %622 = vmatprep.subr.mxu0 0.0
        %623 = vmatpush1.msra.mxu0 %v603
        %624 = vmatprep.subr.mxu0 0.0
        %625 = vmatpush1.msra.mxu0 %v602
        %626 = vmatprep.subr.mxu0 0.0
        %627 = vmatpush1.msra.mxu0 %v601
        %628 = vmatprep.subr.mxu0 0.0
        %629 = vmatpush1.msra.mxu0 %v600
        %630 = vmatprep.subr.mxu0 0.0
        %631 = vmatpush1.msra.mxu0 %v599
        %632 = vmatprep.subr.mxu0 0.0
        %633 = vmatpush1.msra.mxu0 %v598
        %634 = vmatprep.subr.mxu0 0.0
        %635 = vmatpush1.msra.mxu0 %v597
        %636 = vmatprep.subr.mxu0 0.0
        %637 = vmatpush1.msra.mxu0 %v596
        %638 = vmatprep.subr.mxu0 0.0
        %639 = vmatpush1.msra.mxu0 %v595
        %640 = vmatprep.subr.mxu0 0.0
        %641 = vmatpush1.msra.mxu0 %v594
        %642 = vmatprep.subr.mxu0 0.0
        %643 = vmatpush2.msra.mxu0 0.0
        %644 = vmatprep.subr.mxu0 0.0
        %645 = vmatpush2.msra.mxu0 0.0
        %646 = vmatprep.subr.mxu0 0.0
        %647 = vmatpush2.msra.mxu0 0.0
        %648 = vmatprep.subr.mxu0 0.0
        %649 = vmatpush2.msra.mxu0 0.0
        %650 = vmatprep.subr.mxu0 0.0
        %651 = vmatpush2.msra.mxu0 0.0
        %652 = vmatprep.subr.mxu0 0.0
        %653 = vmatpush2.msra.mxu0 0.0
        %654 = vmatprep.subr.mxu0 0.0
        %655 = vmatpush2.msra.mxu0 0.0
        %656 = vmatprep.subr.mxu0 0.0
        %657 = vmatpush2.msra.mxu0 0.0
        %658 = vmatprep.subr.mxu0 0.0
        %659 = vmatpush2.msra.mxu0 0.0
        %660 = vmatprep.subr.mxu0 0.0
        %661 = vmatpush2.msra.mxu0 0.0
        %662 = vmatprep.subr.mxu0 0.0
        %663 = vmatpush2.msra.mxu0 0.0
        %664 = vmatprep.subr.mxu0 0.0
        %665 = vmatpush2.msra.mxu0 0.0
        %666 = vmatprep.subr.mxu0 0.0
        %667 = vmatpush2.msra.mxu0 0.0
        %668 = vmatprep.subr.mxu0 0.0
        %669 = vmatpush2.msra.mxu0 0.0
        %670 = vmatprep.subr.mxu0 0.0
        %671 = vmatpush2.msra.mxu0 0.0
        %672 = vmatprep.subr.mxu0 0.0
        %673 = vmatpush2.msra.mxu0 0.0
        %674 = vmatprep.mubr.f32.mxu0 0.0
        %675 = vmatmul.mubr.f32.gmra.mxu0 %v578
        %v676 = vpop.f32.mrf.mxu0
        %v677 = vadd.f32 0.0, %v676
        %v678 = vpop.f32.mrf.mxu0
        %679 = vmatprep.mubr.f32.mxu0 0.0
        %680 = vmatmul.mubr.f32.gmra.mxu0 %v579
        %v681 = vpop.f32.mrf.mxu0
        %v682 = vadd.f32 0.0, %v681
        %v683 = vpop.f32.mrf.mxu0
        %684 = vmatprep.mubr.f32.mxu0 0.0
        %685 = vmatmul.mubr.f32.gmra.mxu0 %v580
        %v686 = vpop.f32.mrf.mxu0
        %v687 = vadd.f32 0.0, %v686
        %v688 = vpop.f32.mrf.mxu0
        %689 = vmatprep.mubr.f32.mxu0 0.0
        %690 = vmatmul.mubr.f32.gmra.mxu0 %v581
        %v691 = vpop.f32.mrf.mxu0
        %v692 = vadd.f32 0.0, %v691
        %v693 = vpop.f32.mrf.mxu0
        %694 = vmatprep.mubr.f32.mxu0 0.0
        %695 = vmatmul.mubr.f32.gmra.mxu0 %v582
        %v696 = vpop.f32.mrf.mxu0
        %v697 = vadd.f32 0.0, %v696
        %v698 = vpop.f32.mrf.mxu0
        %699 = vmatprep.mubr.f32.mxu0 0.0
        %700 = vmatmul.mubr.f32.gmra.mxu0 %v583
        %v701 = vpop.f32.mrf.mxu0
        %v702 = vadd.f32 0.0, %v701
        %v703 = vpop.f32.mrf.mxu0
        %704 = vmatprep.mubr.f32.mxu0 0.0
        %705 = vmatmul.mubr.f32.gmra.mxu0 %v584
        %v706 = vpop.f32.mrf.mxu0
        %v707 = vadd.f32 0.0, %v706
        %v708 = vpop.f32.mrf.mxu0
        %709 = vmatprep.mubr.f32.mxu0 0.0
        %710 = vmatmul.mubr.f32.gmra.mxu0 %v585
        %v711 = vpop.f32.mrf.mxu0
        %v712 = vadd.f32 0.0, %v711
        %v713 = vpop.f32.mrf.mxu0
        %714 = vmatprep.mubr.f32.mxu0 0.0
        %715 = vmatmul.mubr.f32.gmra.mxu0 %v586
        %v716 = vpop.f32.mrf.mxu0
        %v717 = vadd.f32 0.0, %v716
        %v718 = vpop.f32.mrf.mxu0
        %719 = vmatprep.mubr.f32.mxu0 0.0
        %720 = vmatmul.mubr.f32.gmra.mxu0 %v587
        %v721 = vpop.f32.mrf.mxu0
        %v722 = vadd.f32 0.0, %v721
        %v723 = vpop.f32.mrf.mxu0
        %724 = vmatprep.mubr.f32.mxu0 0.0
        %725 = vmatmul.mubr.f32.gmra.mxu0 %v588
        %v726 = vpop.f32.mrf.mxu0
        %v727 = vadd.f32 0.0, %v726
        %v728 = vpop.f32.mrf.mxu0
        %729 = vmatprep.mubr.f32.mxu0 0.0
        %730 = vmatmul.mubr.f32.gmra.mxu0 %v589
        %v731 = vpop.f32.mrf.mxu0
        %v732 = vadd.f32 0.0, %v731
        %v733 = vpop.f32.mrf.mxu0
        %734 = vmatprep.mubr.f32.mxu0 0.0
        %735 = vmatmul.mubr.f32.gmra.mxu0 %v590
        %v736 = vpop.f32.mrf.mxu0
        %v737 = vadd.f32 0.0, %v736
        %v738 = vpop.f32.mrf.mxu0
        %739 = vmatprep.mubr.f32.mxu0 0.0
        %740 = vmatmul.mubr.f32.gmra.mxu0 %v591
        %v741 = vpop.f32.mrf.mxu0
        %v742 = vadd.f32 0.0, %v741
        %v743 = vpop.f32.mrf.mxu0
        %744 = vmatprep.mubr.f32.mxu0 0.0
        %745 = vmatmul.mubr.f32.gmra.mxu0 %v592
        %v746 = vpop.f32.mrf.mxu0
        %v747 = vadd.f32 0.0, %v746
        %v748 = vpop.f32.mrf.mxu0
        %749 = vmatprep.mubr.f32.mxu0 0.0
        %750 = vmatmul.mubr.f32.gmra.mxu0 %v593
        %v751 = vpop.f32.mrf.mxu0
        %v752 = vadd.f32 0.0, %v751
        %v753 = vpop.f32.mrf.mxu0
        %754 = vdwg.mxu0
        %v755 = vld [vmem:[#allocation7] sm:$0xff]
        %v756 = vld [vmem:[#allocation7 + $0x8] sm:$0xff]
        %v757 = vld [vmem:[#allocation7 + $0x10] sm:$0xff]
        %v758 = vld [vmem:[#allocation7 + $0x18] sm:$0xff]
        %v759 = vld [vmem:[#allocation7 + $0x20] sm:$0xff]
        %v760 = vld [vmem:[#allocation7 + $0x28] sm:$0xff]
        %v761 = vld [vmem:[#allocation7 + $0x30] sm:$0xff]
        %v762 = vld [vmem:[#allocation7 + $0x38] sm:$0xff]
        %v763 = vld [vmem:[#allocation7 + $0x40] sm:$0xff]
        %v764 = vld [vmem:[#allocation7 + $0x48] sm:$0xff]
        %v765 = vld [vmem:[#allocation7 + $0x50] sm:$0xff]
        %v766 = vld [vmem:[#allocation7 + $0x58] sm:$0xff]
        %v767 = vld [vmem:[#allocation7 + $0x60] sm:$0xff]
        %v768 = vld [vmem:[#allocation7 + $0x68] sm:$0xff]
        %v769 = vld [vmem:[#allocation7 + $0x70] sm:$0xff]
        %v770 = vld [vmem:[#allocation7 + $0x78] sm:$0xff]
        %v771 = vld [vmem:[%s3] sm:$0x1]
        %v773 = vlaneseq
        %v774 = vshrl.u32 %v773, 7
        %v775 = vsub.s32 0, %v774
        %v776 = vrot.slane %v771, %v775
        %778 = vmatprep.subr.mxu0 0.0
        %779 = vmatpush1.msra.mxu0 %v770
        %780 = vmatprep.subr.mxu0 0.0
        %781 = vmatpush1.msra.mxu0 %v769
        %782 = vmatprep.subr.mxu0 0.0
        %783 = vmatpush1.msra.mxu0 %v768
        %784 = vmatprep.subr.mxu0 0.0
        %785 = vmatpush1.msra.mxu0 %v767
        %786 = vmatprep.subr.mxu0 0.0
        %787 = vmatpush1.msra.mxu0 %v766
        %788 = vmatprep.subr.mxu0 0.0
        %789 = vmatpush1.msra.mxu0 %v765
        %790 = vmatprep.subr.mxu0 0.0
        %791 = vmatpush1.msra.mxu0 %v764
        %792 = vmatprep.subr.mxu0 0.0
        %793 = vmatpush1.msra.mxu0 %v763
        %794 = vmatprep.subr.mxu0 0.0
        %795 = vmatpush1.msra.mxu0 %v762
        %796 = vmatprep.subr.mxu0 0.0
        %797 = vmatpush1.msra.mxu0 %v761
        %798 = vmatprep.subr.mxu0 0.0
        %799 = vmatpush1.msra.mxu0 %v760
        %800 = vmatprep.subr.mxu0 0.0
        %801 = vmatpush1.msra.mxu0 %v759
        %802 = vmatprep.subr.mxu0 0.0
        %803 = vmatpush1.msra.mxu0 %v758
        %804 = vmatprep.subr.mxu0 0.0
        %805 = vmatpush1.msra.mxu0 %v757
        %806 = vmatprep.subr.mxu0 0.0
        %807 = vmatpush1.msra.mxu0 %v756
        %808 = vmatprep.subr.mxu0 0.0
        %809 = vmatpush1.msra.mxu0 %v755
        %810 = vmatprep.subr.mxu0 0.0
        %811 = vmatpush2.msra.mxu0 0.0
        %812 = vmatprep.subr.mxu0 0.0
        %813 = vmatpush2.msra.mxu0 0.0
        %814 = vmatprep.subr.mxu0 0.0
        %815 = vmatpush2.msra.mxu0 0.0
        %816 = vmatprep.subr.mxu0 0.0
        %817 = vmatpush2.msra.mxu0 0.0
        %818 = vmatprep.subr.mxu0 0.0
        %819 = vmatpush2.msra.mxu0 0.0
        %820 = vmatprep.subr.mxu0 0.0
        %821 = vmatpush2.msra.mxu0 0.0
        %822 = vmatprep.subr.mxu0 0.0
        %823 = vmatpush2.msra.mxu0 0.0
        %824 = vmatprep.subr.mxu0 0.0
        %825 = vmatpush2.msra.mxu0 0.0
        %826 = vmatprep.subr.mxu0 0.0
        %827 = vmatpush2.msra.mxu0 0.0
        %828 = vmatprep.subr.mxu0 0.0
        %829 = vmatpush2.msra.mxu0 0.0
        %830 = vmatprep.subr.mxu0 0.0
        %831 = vmatpush2.msra.mxu0 0.0
        %832 = vmatprep.subr.mxu0 0.0
        %833 = vmatpush2.msra.mxu0 0.0
        %834 = vmatprep.subr.mxu0 0.0
        %835 = vmatpush2.msra.mxu0 0.0
        %836 = vmatprep.subr.mxu0 0.0
        %837 = vmatpush2.msra.mxu0 0.0
        %838 = vmatprep.subr.mxu0 0.0
        %839 = vmatpush2.msra.mxu0 0.0
        %840 = vmatprep.subr.mxu0 0.0
        %841 = vmatpush2.msra.mxu0 0.0
        %842 = vmatprep.mubr.f32.mxu0 0.0
        %843 = vmatmul.mubr.f32.gmra.mxu0 %v677
        %v844 = vpop.f32.mrf.mxu0
        %v845 = vadd.f32 %v776, %v844
        %v846 = vpop.f32.mrf.mxu0
        %847 = vmatprep.mubr.f32.mxu0 0.0
        %848 = vmatmul.mubr.f32.gmra.mxu0 %v682
        %v849 = vpop.f32.mrf.mxu0
        %v850 = vadd.f32 %v776, %v849
        %v851 = vpop.f32.mrf.mxu0
        %852 = vmatprep.mubr.f32.mxu0 0.0
        %853 = vmatmul.mubr.f32.gmra.mxu0 %v687
        %v854 = vpop.f32.mrf.mxu0
        %v855 = vadd.f32 %v776, %v854
        %v856 = vpop.f32.mrf.mxu0
        %857 = vmatprep.mubr.f32.mxu0 0.0
        %858 = vmatmul.mubr.f32.gmra.mxu0 %v692
        %v859 = vpop.f32.mrf.mxu0
        %v860 = vadd.f32 %v776, %v859
        %v861 = vpop.f32.mrf.mxu0
        %862 = vmatprep.mubr.f32.mxu0 0.0
        %863 = vmatmul.mubr.f32.gmra.mxu0 %v697
        %v864 = vpop.f32.mrf.mxu0
        %v865 = vadd.f32 %v776, %v864
        %v866 = vpop.f32.mrf.mxu0
        %867 = vmatprep.mubr.f32.mxu0 0.0
        %868 = vmatmul.mubr.f32.gmra.mxu0 %v702
        %v869 = vpop.f32.mrf.mxu0
        %v870 = vadd.f32 %v776, %v869
        %v871 = vpop.f32.mrf.mxu0
        %872 = vmatprep.mubr.f32.mxu0 0.0
        %873 = vmatmul.mubr.f32.gmra.mxu0 %v707
        %v874 = vpop.f32.mrf.mxu0
        %v875 = vadd.f32 %v776, %v874
        %v876 = vpop.f32.mrf.mxu0
        %877 = vmatprep.mubr.f32.mxu0 0.0
        %878 = vmatmul.mubr.f32.gmra.mxu0 %v712
        %v879 = vpop.f32.mrf.mxu0
        %v880 = vadd.f32 %v776, %v879
        %v881 = vpop.f32.mrf.mxu0
        %882 = vmatprep.mubr.f32.mxu0 0.0
        %883 = vmatmul.mubr.f32.gmra.mxu0 %v717
        %v884 = vpop.f32.mrf.mxu0
        %v885 = vadd.f32 %v776, %v884
        %v886 = vpop.f32.mrf.mxu0
        %887 = vmatprep.mubr.f32.mxu0 0.0
        %888 = vmatmul.mubr.f32.gmra.mxu0 %v722
        %v889 = vpop.f32.mrf.mxu0
        %v890 = vadd.f32 %v776, %v889
        %v891 = vpop.f32.mrf.mxu0
        %892 = vmatprep.mubr.f32.mxu0 0.0
        %893 = vmatmul.mubr.f32.gmra.mxu0 %v727
        %v894 = vpop.f32.mrf.mxu0
        %v895 = vadd.f32 %v776, %v894
        %v896 = vpop.f32.mrf.mxu0
        %897 = vmatprep.mubr.f32.mxu0 0.0
        %898 = vmatmul.mubr.f32.gmra.mxu0 %v732
        %v899 = vpop.f32.mrf.mxu0
        %v900 = vadd.f32 %v776, %v899
        %v901 = vpop.f32.mrf.mxu0
        %902 = vmatprep.mubr.f32.mxu0 0.0
        %903 = vmatmul.mubr.f32.gmra.mxu0 %v737
        %v904 = vpop.f32.mrf.mxu0
        %v905 = vadd.f32 %v776, %v904
        %v906 = vpop.f32.mrf.mxu0
        %907 = vmatprep.mubr.f32.mxu0 0.0
        %908 = vmatmul.mubr.f32.gmra.mxu0 %v742
        %v909 = vpop.f32.mrf.mxu0
        %v910 = vadd.f32 %v776, %v909
        %v911 = vpop.f32.mrf.mxu0
        %912 = vmatprep.mubr.f32.mxu0 0.0
        %913 = vmatmul.mubr.f32.gmra.mxu0 %v747
        %v914 = vpop.f32.mrf.mxu0
        %v915 = vadd.f32 %v776, %v914
        %v916 = vpop.f32.mrf.mxu0
        %917 = vmatprep.mubr.f32.mxu0 0.0
        %918 = vmatmul.mubr.f32.gmra.mxu0 %v752
        %v919 = vpop.f32.mrf.mxu0
        %v920 = vadd.f32 %v776, %v919
        %v921 = vpop.f32.mrf.mxu0
        %922 = vdwg.mxu0
        %v923 = vmax.f32 %v845, 0.0
        %v924 = vmax.f32 %v850, 0.0
        %v925 = vmax.f32 %v855, 0.0
        %v926 = vmax.f32 %v860, 0.0
        %v927 = vmax.f32 %v865, 0.0
        %v928 = vmax.f32 %v870, 0.0
        %v929 = vmax.f32 %v875, 0.0
        %v930 = vmax.f32 %v880, 0.0
        %v931 = vmax.f32 %v885, 0.0
        %v932 = vmax.f32 %v890, 0.0
        %v933 = vmax.f32 %v895, 0.0
        %v934 = vmax.f32 %v900, 0.0
        %v935 = vmax.f32 %v905, 0.0
        %v936 = vmax.f32 %v910, 0.0
        %v937 = vmax.f32 %v915, 0.0
        %v938 = vmax.f32 %v920, 0.0
        %939 = vmatprep.subr.mxu0 0.0
        %940 = vmatpush1.msra.mxu0 %v938
        %941 = vmatprep.subr.mxu0 0.0
        %942 = vmatpush1.msra.mxu0 %v937
        %943 = vmatprep.subr.mxu0 0.0
        %944 = vmatpush1.msra.mxu0 %v936
        %945 = vmatprep.subr.mxu0 0.0
        %946 = vmatpush1.msra.mxu0 %v935
        %947 = vmatprep.subr.mxu0 0.0
        %948 = vmatpush1.msra.mxu0 %v934
        %949 = vmatprep.subr.mxu0 0.0
        %950 = vmatpush1.msra.mxu0 %v933
        %951 = vmatprep.subr.mxu0 0.0
        %952 = vmatpush1.msra.mxu0 %v932
        %953 = vmatprep.subr.mxu0 0.0
        %954 = vmatpush1.msra.mxu0 %v931
        %955 = vmatprep.subr.mxu0 0.0
        %956 = vmatpush1.msra.mxu0 %v930
        %957 = vmatprep.subr.mxu0 0.0
        %958 = vmatpush1.msra.mxu0 %v929
        %959 = vmatprep.subr.mxu0 0.0
        %960 = vmatpush1.msra.mxu0 %v928
        %961 = vmatprep.subr.mxu0 0.0
        %962 = vmatpush1.msra.mxu0 %v927
        %963 = vmatprep.subr.mxu0 0.0
        %964 = vmatpush1.msra.mxu0 %v926
        %965 = vmatprep.subr.mxu0 0.0
        %966 = vmatpush1.msra.mxu0 %v925
        %967 = vmatprep.subr.mxu0 0.0
        %968 = vmatpush1.msra.mxu0 %v924
        %969 = vmatprep.subr.mxu0 0.0
        %970 = vmatpush1.msra.mxu0 %v923
        %971 = vmatprep.subr.mxu0 0.0
        %972 = vmatpush2.msra.mxu0 0.0
        %973 = vmatprep.subr.mxu0 0.0
        %974 = vmatpush2.msra.mxu0 0.0
        %975 = vmatprep.subr.mxu0 0.0
        %976 = vmatpush2.msra.mxu0 0.0
        %977 = vmatprep.subr.mxu0 0.0
        %978 = vmatpush2.msra.mxu0 0.0
        %979 = vmatprep.subr.mxu0 0.0
        %980 = vmatpush2.msra.mxu0 0.0
        %981 = vmatprep.subr.mxu0 0.0
        %982 = vmatpush2.msra.mxu0 0.0
        %983 = vmatprep.subr.mxu0 0.0
        %984 = vmatpush2.msra.mxu0 0.0
        %985 = vmatprep.subr.mxu0 0.0
        %986 = vmatpush2.msra.mxu0 0.0
        %987 = vmatprep.subr.mxu0 0.0
        %988 = vmatpush2.msra.mxu0 0.0
        %989 = vmatprep.subr.mxu0 0.0
        %990 = vmatpush2.msra.mxu0 0.0
        %991 = vmatprep.subr.mxu0 0.0
        %992 = vmatpush2.msra.mxu0 0.0
        %993 = vmatprep.subr.mxu0 0.0
        %994 = vmatpush2.msra.mxu0 0.0
        %995 = vmatprep.subr.mxu0 0.0
        %996 = vmatpush2.msra.mxu0 0.0
        %997 = vmatprep.subr.mxu0 0.0
        %998 = vmatpush2.msra.mxu0 0.0
        %999 = vmatprep.subr.mxu0 0.0
        %1000 = vmatpush2.msra.mxu0 0.0
        %1001 = vmatprep.subr.mxu0 0.0
        %1002 = vmatpush2.msra.mxu0 0.0
        %1003 = vmatprep.mubr.f32.mxu0 0.0
        %1004 = vmatmul.mubr.f32.gmra.mxu0 %v578
        %v1005 = vpop.f32.mrf.mxu0
        %v1006 = vadd.f32 0.0, %v1005
        %v1007 = vpop.f32.mrf.mxu0
        %1008 = vmatprep.mubr.f32.mxu0 0.0
        %1009 = vmatmul.mubr.f32.gmra.mxu0 %v579
        %v1010 = vpop.f32.mrf.mxu0
        %v1011 = vadd.f32 0.0, %v1010
        %v1012 = vpop.f32.mrf.mxu0
        %1013 = vmatprep.mubr.f32.mxu0 0.0
        %1014 = vmatmul.mubr.f32.gmra.mxu0 %v580
        %v1015 = vpop.f32.mrf.mxu0
        %v1016 = vadd.f32 0.0, %v1015
        %v1017 = vpop.f32.mrf.mxu0
        %1018 = vmatprep.mubr.f32.mxu0 0.0
        %1019 = vmatmul.mubr.f32.gmra.mxu0 %v581
        %v1020 = vpop.f32.mrf.mxu0
        %v1021 = vadd.f32 0.0, %v1020
        %v1022 = vpop.f32.mrf.mxu0
        %1023 = vmatprep.mubr.f32.mxu0 0.0
        %1024 = vmatmul.mubr.f32.gmra.mxu0 %v582
        %v1025 = vpop.f32.mrf.mxu0
        %v1026 = vadd.f32 0.0, %v1025
        %v1027 = vpop.f32.mrf.mxu0
        %1028 = vmatprep.mubr.f32.mxu0 0.0
        %1029 = vmatmul.mubr.f32.gmra.mxu0 %v583
        %v1030 = vpop.f32.mrf.mxu0
        %v1031 = vadd.f32 0.0, %v1030
        %v1032 = vpop.f32.mrf.mxu0
        %1033 = vmatprep.mubr.f32.mxu0 0.0
        %1034 = vmatmul.mubr.f32.gmra.mxu0 %v584
        %v1035 = vpop.f32.mrf.mxu0
        %v1036 = vadd.f32 0.0, %v1035
        %v1037 = vpop.f32.mrf.mxu0
        %1038 = vmatprep.mubr.f32.mxu0 0.0
        %1039 = vmatmul.mubr.f32.gmra.mxu0 %v585
        %v1040 = vpop.f32.mrf.mxu0
        %v1041 = vadd.f32 0.0, %v1040
        %v1042 = vpop.f32.mrf.mxu0
        %1043 = vmatprep.mubr.f32.mxu0 0.0
        %1044 = vmatmul.mubr.f32.gmra.mxu0 %v586
        %v1045 = vpop.f32.mrf.mxu0
        %v1046 = vadd.f32 0.0, %v1045
        %v1047 = vpop.f32.mrf.mxu0
        %1048 = vmatprep.mubr.f32.mxu0 0.0
        %1049 = vmatmul.mubr.f32.gmra.mxu0 %v587
        %v1050 = vpop.f32.mrf.mxu0
        %v1051 = vadd.f32 0.0, %v1050
        %v1052 = vpop.f32.mrf.mxu0
        %1053 = vmatprep.mubr.f32.mxu0 0.0
        %1054 = vmatmul.mubr.f32.gmra.mxu0 %v588
        %v1055 = vpop.f32.mrf.mxu0
        %v1056 = vadd.f32 0.0, %v1055
        %v1057 = vpop.f32.mrf.mxu0
        %1058 = vmatprep.mubr.f32.mxu0 0.0
        %1059 = vmatmul.mubr.f32.gmra.mxu0 %v589
        %v1060 = vpop.f32.mrf.mxu0
        %v1061 = vadd.f32 0.0, %v1060
        %v1062 = vpop.f32.mrf.mxu0
        %1063 = vmatprep.mubr.f32.mxu0 0.0
        %1064 = vmatmul.mubr.f32.gmra.mxu0 %v590
        %v1065 = vpop.f32.mrf.mxu0
        %v1066 = vadd.f32 0.0, %v1065
        %v1067 = vpop.f32.mrf.mxu0
        %1068 = vmatprep.mubr.f32.mxu0 0.0
        %1069 = vmatmul.mubr.f32.gmra.mxu0 %v591
        %v1070 = vpop.f32.mrf.mxu0
        %v1071 = vadd.f32 0.0, %v1070
        %v1072 = vpop.f32.mrf.mxu0
        %1073 = vmatprep.mubr.f32.mxu0 0.0
        %1074 = vmatmul.mubr.f32.gmra.mxu0 %v592
        %v1075 = vpop.f32.mrf.mxu0
        %v1076 = vadd.f32 0.0, %v1075
        %v1077 = vpop.f32.mrf.mxu0
        %1078 = vmatprep.mubr.f32.mxu0 0.0
        %1079 = vmatmul.mubr.f32.gmra.mxu0 %v593
        %v1080 = vpop.f32.mrf.mxu0
        %v1081 = vadd.f32 0.0, %v1080
        %v1082 = vpop.f32.mrf.mxu0
        %1083 = vdwg.mxu0
        %v1084 = vld [vmem:[#allocation8] sm:$0xff]
        %v1085 = vld [vmem:[#allocation8 + $0x8] sm:$0xff]
        %v1086 = vld [vmem:[#allocation8 + $0x10] sm:$0xff]
        %v1087 = vld [vmem:[#allocation8 + $0x18] sm:$0xff]
        %v1088 = vld [vmem:[#allocation8 + $0x20] sm:$0xff]
        %v1089 = vld [vmem:[#allocation8 + $0x28] sm:$0xff]
        %v1090 = vld [vmem:[#allocation8 + $0x30] sm:$0xff]
        %v1091 = vld [vmem:[#allocation8 + $0x38] sm:$0xff]
        %v1092 = vld [vmem:[#allocation8 + $0x40] sm:$0xff]
        %v1093 = vld [vmem:[#allocation8 + $0x48] sm:$0xff]
        %v1094 = vld [vmem:[#allocation8 + $0x50] sm:$0xff]
        %v1095 = vld [vmem:[#allocation8 + $0x58] sm:$0xff]
        %v1096 = vld [vmem:[#allocation8 + $0x60] sm:$0xff]
        %v1097 = vld [vmem:[#allocation8 + $0x68] sm:$0xff]
        %v1098 = vld [vmem:[#allocation8 + $0x70] sm:$0xff]
        %v1099 = vld [vmem:[#allocation8 + $0x78] sm:$0xff]
        %v1100 = vld [vmem:[#allocation8 + $0x80] sm:$0xff]
        %v1101 = vld [vmem:[#allocation8 + $0x88] sm:$0xff]
        %v1102 = vld [vmem:[#allocation8 + $0x90] sm:$0xff]
        %v1103 = vld [vmem:[#allocation8 + $0x98] sm:$0xff]
        %v1104 = vld [vmem:[#allocation8 + $0xa0] sm:$0xff]
        %v1105 = vld [vmem:[#allocation8 + $0xa8] sm:$0xff]
        %v1106 = vld [vmem:[#allocation8 + $0xb0] sm:$0xff]
        %v1107 = vld [vmem:[#allocation8 + $0xb8] sm:$0xff]
        %v1108 = vld [vmem:[#allocation8 + $0xc0] sm:$0xff]
        %v1109 = vld [vmem:[#allocation8 + $0xc8] sm:$0xff]
        %v1110 = vld [vmem:[#allocation8 + $0xd0] sm:$0xff]
        %v1111 = vld [vmem:[#allocation8 + $0xd8] sm:$0xff]
        %v1112 = vld [vmem:[#allocation8 + $0xe0] sm:$0xff]
        %v1113 = vld [vmem:[#allocation8 + $0xe8] sm:$0xff]
        %v1114 = vld [vmem:[#allocation8 + $0xf0] sm:$0xff]
        %v1115 = vld [vmem:[#allocation8 + $0xf8] sm:$0xff]
        %v1116 = vld [vmem:[%s5] sm:$0x3]
        %v1118 = vlaneseq
        %v1119 = vshrl.u32 %v1118, 7
        %v1120 = vsub.s32 0, %v1119
        %v1121 = vrot.slane %v1116, %v1120
        %v1122 = vlaneseq
        %v1123 = vshrl.u32 %v1122, 7
        %v1124 = vsub.s32 1, %v1123
        %v1125 = vrot.slane %v1116, %v1124
        %1128 = vmatprep.subr.mxu0 %v1115
        %1129 = vmatpush1.msra.mxu0 %v1114
        %1130 = vmatprep.subr.mxu0 %v1113
        %1131 = vmatpush1.msra.mxu0 %v1112
        %1132 = vmatprep.subr.mxu0 %v1111
        %1133 = vmatpush1.msra.mxu0 %v1110
        %1134 = vmatprep.subr.mxu0 %v1109
        %1135 = vmatpush1.msra.mxu0 %v1108
        %1136 = vmatprep.subr.mxu0 %v1107
        %1137 = vmatpush1.msra.mxu0 %v1106
        %1138 = vmatprep.subr.mxu0 %v1105
        %1139 = vmatpush1.msra.mxu0 %v1104
        %1140 = vmatprep.subr.mxu0 %v1103
        %1141 = vmatpush1.msra.mxu0 %v1102
        %1142 = vmatprep.subr.mxu0 %v1101
        %1143 = vmatpush1.msra.mxu0 %v1100
        %1144 = vmatprep.subr.mxu0 %v1099
        %1145 = vmatpush1.msra.mxu0 %v1098
        %1146 = vmatprep.subr.mxu0 %v1097
        %1147 = vmatpush1.msra.mxu0 %v1096
        %1148 = vmatprep.subr.mxu0 %v1095
        %1149 = vmatpush1.msra.mxu0 %v1094
        %1150 = vmatprep.subr.mxu0 %v1093
        %1151 = vmatpush1.msra.mxu0 %v1092
        %1152 = vmatprep.subr.mxu0 %v1091
        %1153 = vmatpush1.msra.mxu0 %v1090
        %1154 = vmatprep.subr.mxu0 %v1089
        %1155 = vmatpush1.msra.mxu0 %v1088
        %1156 = vmatprep.subr.mxu0 %v1087
        %1157 = vmatpush1.msra.mxu0 %v1086
        %1158 = vmatprep.subr.mxu0 %v1085
        %1159 = vmatpush1.msra.mxu0 %v1084
        %1160 = vmatprep.subr.mxu0 0.0
        %1161 = vmatpush2.msra.mxu0 0.0
        %1162 = vmatprep.subr.mxu0 0.0
        %1163 = vmatpush2.msra.mxu0 0.0
        %1164 = vmatprep.subr.mxu0 0.0
        %1165 = vmatpush2.msra.mxu0 0.0
        %1166 = vmatprep.subr.mxu0 0.0
        %1167 = vmatpush2.msra.mxu0 0.0
        %1168 = vmatprep.subr.mxu0 0.0
        %1169 = vmatpush2.msra.mxu0 0.0
        %1170 = vmatprep.subr.mxu0 0.0
        %1171 = vmatpush2.msra.mxu0 0.0
        %1172 = vmatprep.subr.mxu0 0.0
        %1173 = vmatpush2.msra.mxu0 0.0
        %1174 = vmatprep.subr.mxu0 0.0
        %1175 = vmatpush2.msra.mxu0 0.0
        %1176 = vmatprep.subr.mxu0 0.0
        %1177 = vmatpush2.msra.mxu0 0.0
        %1178 = vmatprep.subr.mxu0 0.0
        %1179 = vmatpush2.msra.mxu0 0.0
        %1180 = vmatprep.subr.mxu0 0.0
        %1181 = vmatpush2.msra.mxu0 0.0
        %1182 = vmatprep.subr.mxu0 0.0
        %1183 = vmatpush2.msra.mxu0 0.0
        %1184 = vmatprep.subr.mxu0 0.0
        %1185 = vmatpush2.msra.mxu0 0.0
        %1186 = vmatprep.subr.mxu0 0.0
        %1187 = vmatpush2.msra.mxu0 0.0
        %1188 = vmatprep.subr.mxu0 0.0
        %1189 = vmatpush2.msra.mxu0 0.0
        %1190 = vmatprep.subr.mxu0 0.0
        %1191 = vmatpush2.msra.mxu0 0.0
        %1192 = vmatprep.mubr.f32.mxu0 0.0
        %1193 = vmatmul.mubr.f32.gmra.mxu0 %v1006
        %v1194 = vpop.f32.mrf.mxu0
        %v1195 = vadd.f32 %v1121, %v1194
        %v1196 = vpop.f32.mrf.mxu0
        %v1197 = vadd.f32 %v1125, %v1196
        %1198 = vmatprep.mubr.f32.mxu0 0.0
        %1199 = vmatmul.mubr.f32.gmra.mxu0 %v1011
        %v1200 = vpop.f32.mrf.mxu0
        %v1201 = vadd.f32 %v1121, %v1200
        %v1202 = vpop.f32.mrf.mxu0
        %v1203 = vadd.f32 %v1125, %v1202
        %1204 = vmatprep.mubr.f32.mxu0 0.0
        %1205 = vmatmul.mubr.f32.gmra.mxu0 %v1016
        %v1206 = vpop.f32.mrf.mxu0
        %v1207 = vadd.f32 %v1121, %v1206
        %v1208 = vpop.f32.mrf.mxu0
        %v1209 = vadd.f32 %v1125, %v1208
        %1210 = vmatprep.mubr.f32.mxu0 0.0
        %1211 = vmatmul.mubr.f32.gmra.mxu0 %v1021
        %v1212 = vpop.f32.mrf.mxu0
        %v1213 = vadd.f32 %v1121, %v1212
        %v1214 = vpop.f32.mrf.mxu0
        %v1215 = vadd.f32 %v1125, %v1214
        %1216 = vmatprep.mubr.f32.mxu0 0.0
        %1217 = vmatmul.mubr.f32.gmra.mxu0 %v1026
        %v1218 = vpop.f32.mrf.mxu0
        %v1219 = vadd.f32 %v1121, %v1218
        %v1220 = vpop.f32.mrf.mxu0
        %v1221 = vadd.f32 %v1125, %v1220
        %1222 = vmatprep.mubr.f32.mxu0 0.0
        %1223 = vmatmul.mubr.f32.gmra.mxu0 %v1031
        %v1224 = vpop.f32.mrf.mxu0
        %v1225 = vadd.f32 %v1121, %v1224
        %v1226 = vpop.f32.mrf.mxu0
        %v1227 = vadd.f32 %v1125, %v1226
        %1228 = vmatprep.mubr.f32.mxu0 0.0
        %1229 = vmatmul.mubr.f32.gmra.mxu0 %v1036
        %v1230 = vpop.f32.mrf.mxu0
        %v1231 = vadd.f32 %v1121, %v1230
        %v1232 = vpop.f32.mrf.mxu0
        %v1233 = vadd.f32 %v1125, %v1232
        %1234 = vmatprep.mubr.f32.mxu0 0.0
        %1235 = vmatmul.mubr.f32.gmra.mxu0 %v1041
        %v1236 = vpop.f32.mrf.mxu0
        %v1237 = vadd.f32 %v1121, %v1236
        %v1238 = vpop.f32.mrf.mxu0
        %v1239 = vadd.f32 %v1125, %v1238
        %1240 = vmatprep.mubr.f32.mxu0 0.0
        %1241 = vmatmul.mubr.f32.gmra.mxu0 %v1046
        %v1242 = vpop.f32.mrf.mxu0
        %v1243 = vadd.f32 %v1121, %v1242
        %v1244 = vpop.f32.mrf.mxu0
        %v1245 = vadd.f32 %v1125, %v1244
        %1246 = vmatprep.mubr.f32.mxu0 0.0
        %1247 = vmatmul.mubr.f32.gmra.mxu0 %v1051
        %v1248 = vpop.f32.mrf.mxu0
        %v1249 = vadd.f32 %v1121, %v1248
        %v1250 = vpop.f32.mrf.mxu0
        %v1251 = vadd.f32 %v1125, %v1250
        %1252 = vmatprep.mubr.f32.mxu0 0.0
        %1253 = vmatmul.mubr.f32.gmra.mxu0 %v1056
        %v1254 = vpop.f32.mrf.mxu0
        %v1255 = vadd.f32 %v1121, %v1254
        %v1256 = vpop.f32.mrf.mxu0
        %v1257 = vadd.f32 %v1125, %v1256
        %1258 = vmatprep.mubr.f32.mxu0 0.0
        %1259 = vmatmul.mubr.f32.gmra.mxu0 %v1061
        %v1260 = vpop.f32.mrf.mxu0
        %v1261 = vadd.f32 %v1121, %v1260
        %v1262 = vpop.f32.mrf.mxu0
        %v1263 = vadd.f32 %v1125, %v1262
        %1264 = vmatprep.mubr.f32.mxu0 0.0
        %1265 = vmatmul.mubr.f32.gmra.mxu0 %v1066
        %v1266 = vpop.f32.mrf.mxu0
        %v1267 = vadd.f32 %v1121, %v1266
        %v1268 = vpop.f32.mrf.mxu0
        %v1269 = vadd.f32 %v1125, %v1268
        %1270 = vmatprep.mubr.f32.mxu0 0.0
        %1271 = vmatmul.mubr.f32.gmra.mxu0 %v1071
        %v1272 = vpop.f32.mrf.mxu0
        %v1273 = vadd.f32 %v1121, %v1272
        %v1274 = vpop.f32.mrf.mxu0
        %v1275 = vadd.f32 %v1125, %v1274
        %1276 = vmatprep.mubr.f32.mxu0 0.0
        %1277 = vmatmul.mubr.f32.gmra.mxu0 %v1076
        %v1278 = vpop.f32.mrf.mxu0
        %v1279 = vadd.f32 %v1121, %v1278
        %v1280 = vpop.f32.mrf.mxu0
        %v1281 = vadd.f32 %v1125, %v1280
        %1282 = vmatprep.mubr.f32.mxu0 0.0
        %1283 = vmatmul.mubr.f32.gmra.mxu0 %v1081
        %v1284 = vpop.f32.mrf.mxu0
        %v1285 = vadd.f32 %v1121, %v1284
        %v1286 = vpop.f32.mrf.mxu0
        %v1287 = vadd.f32 %v1125, %v1286
        %1288 = vdwg.mxu0
        %v1289 = vld [vmem:[%s522] sm:$0xff]
        %v1290 = vld [vmem:[%s522 + $0x8] sm:$0xff]
        %v1291 = vld [vmem:[%s522 + $0x10] sm:$0xff]
        %v1292 = vld [vmem:[%s522 + $0x18] sm:$0xff]
        %v1293 = vld [vmem:[%s522 + $0x20] sm:$0xff]
        %v1294 = vld [vmem:[%s522 + $0x28] sm:$0xff]
        %v1295 = vld [vmem:[%s522 + $0x30] sm:$0xff]
        %v1296 = vld [vmem:[%s522 + $0x38] sm:$0xff]
        %v1297 = vld [vmem:[%s522 + $0x40] sm:$0xff]
        %v1298 = vld [vmem:[%s522 + $0x48] sm:$0xff]
        %v1299 = vld [vmem:[%s522 + $0x50] sm:$0xff]
        %v1300 = vld [vmem:[%s522 + $0x58] sm:$0xff]
        %v1301 = vld [vmem:[%s522 + $0x60] sm:$0xff]
        %v1302 = vld [vmem:[%s522 + $0x68] sm:$0xff]
        %v1303 = vld [vmem:[%s522 + $0x70] sm:$0xff]
        %v1304 = vld [vmem:[%s522 + $0x78] sm:$0xff]
        %v1305 = vmul.f32 %v1197, 1.442695
        %v1306 = vpow.pop %v1305
        %v1307 = vmul.f32 %v1203, 1.442695
        %v1308 = vpow.pop %v1307
        %v1309 = vmul.f32 %v1209, 1.442695
        %v1310 = vpow.pop %v1309
        %v1311 = vmul.f32 %v1215, 1.442695
        %v1312 = vpow.pop %v1311
        %v1313 = vmul.f32 %v1221, 1.442695
        %v1314 = vpow.pop %v1313
        %v1315 = vmul.f32 %v1227, 1.442695
        %v1316 = vpow.pop %v1315
        %v1317 = vmul.f32 %v1233, 1.442695
        %v1318 = vpow.pop %v1317
        %v1319 = vmul.f32 %v1239, 1.442695
        %v1320 = vpow.pop %v1319
        %v1321 = vmul.f32 %v1245, 1.442695
        %v1322 = vpow.pop %v1321
        %v1323 = vmul.f32 %v1251, 1.442695
        %v1324 = vpow.pop %v1323
        %v1325 = vmul.f32 %v1257, 1.442695
        %v1326 = vpow.pop %v1325
        %v1327 = vmul.f32 %v1263, 1.442695
        %v1328 = vpow.pop %v1327
        %v1329 = vmul.f32 %v1269, 1.442695
        %v1330 = vpow.pop %v1329
        %v1331 = vmul.f32 %v1275, 1.442695
        %v1332 = vpow.pop %v1331
        %v1333 = vmul.f32 %v1281, 1.442695
        %v1334 = vpow.pop %v1333
        %v1335 = vmul.f32 %v1287, 1.442695
        %v1336 = vpow.pop %v1335
        %v1337 = vmul.f32 %v1289, %v1306
        %v1338 = vmul.f32 %v1290, %v1308
        %v1339 = vmul.f32 %v1291, %v1310
        %v1340 = vmul.f32 %v1292, %v1312
        %v1341 = vmul.f32 %v1293, %v1314
        %v1342 = vmul.f32 %v1294, %v1316
        %v1343 = vmul.f32 %v1295, %v1318
        %v1344 = vmul.f32 %v1296, %v1320
        %v1345 = vmul.f32 %v1297, %v1322
        %v1346 = vmul.f32 %v1298, %v1324
        %v1347 = vmul.f32 %v1299, %v1326
        %v1348 = vmul.f32 %v1300, %v1328
        %v1349 = vmul.f32 %v1301, %v1330
        %v1350 = vmul.f32 %v1302, %v1332
        %v1351 = vmul.f32 %v1303, %v1334
        %v1352 = vmul.f32 %v1304, %v1336
        %v1353 = vadd.f32 %v1195, %v1337
        %v1354 = vadd.f32 %v1201, %v1338
        %v1355 = vadd.f32 %v1207, %v1339
        %v1356 = vadd.f32 %v1213, %v1340
        %v1357 = vadd.f32 %v1219, %v1341
        %v1358 = vadd.f32 %v1225, %v1342
        %v1359 = vadd.f32 %v1231, %v1343
        %v1360 = vadd.f32 %v1237, %v1344
        %v1361 = vadd.f32 %v1243, %v1345
        %v1362 = vadd.f32 %v1249, %v1346
        %v1363 = vadd.f32 %v1255, %v1347
        %v1364 = vadd.f32 %v1261, %v1348
        %v1365 = vadd.f32 %v1267, %v1349
        %v1366 = vadd.f32 %v1273, %v1350
        %v1367 = vadd.f32 %v1279, %v1351
        %v1368 = vadd.f32 %v1285, %v1352
        %v1369 = vld [vmem:[#allocation10] sm:$0xff]
        %v1370 = vld [vmem:[#allocation10 + $0x8] sm:$0xff]
        %v1371 = vld [vmem:[#allocation10 + $0x10] sm:$0xff]
        %v1372 = vld [vmem:[#allocation10 + $0x18] sm:$0xff]
        %v1373 = vld [vmem:[#allocation10 + $0x20] sm:$0xff]
        %v1374 = vld [vmem:[#allocation10 + $0x28] sm:$0xff]
        %v1375 = vld [vmem:[#allocation10 + $0x30] sm:$0xff]
        %v1376 = vld [vmem:[#allocation10 + $0x38] sm:$0xff]
        %v1377 = vld [vmem:[#allocation10 + $0x40] sm:$0xff]
        %v1378 = vld [vmem:[#allocation10 + $0x48] sm:$0xff]
        %v1379 = vld [vmem:[#allocation10 + $0x50] sm:$0xff]
        %v1380 = vld [vmem:[#allocation10 + $0x58] sm:$0xff]
        %v1381 = vld [vmem:[#allocation10 + $0x60] sm:$0xff]
        %v1382 = vld [vmem:[#allocation10 + $0x68] sm:$0xff]
        %v1383 = vld [vmem:[#allocation10 + $0x70] sm:$0xff]
        %v1384 = vld [vmem:[#allocation10 + $0x78] sm:$0xff]
        %v1385 = vld [vmem:[%s7] sm:$0x1]
        %v1387 = vlaneseq
        %v1388 = vshrl.u32 %v1387, 7
        %v1389 = vsub.s32 0, %v1388
        %v1390 = vrot.slane %v1385, %v1389
        %1392 = vmatprep.subr.mxu0 0.0
        %1393 = vmatpush1.msra.mxu0 %v1384
        %1394 = vmatprep.subr.mxu0 0.0
        %1395 = vmatpush1.msra.mxu0 %v1383
        %1396 = vmatprep.subr.mxu0 0.0
        %1397 = vmatpush1.msra.mxu0 %v1382
        %1398 = vmatprep.subr.mxu0 0.0
        %1399 = vmatpush1.msra.mxu0 %v1381
        %1400 = vmatprep.subr.mxu0 0.0
        %1401 = vmatpush1.msra.mxu0 %v1380
        %1402 = vmatprep.subr.mxu0 0.0
        %1403 = vmatpush1.msra.mxu0 %v1379
        %1404 = vmatprep.subr.mxu0 0.0
        %1405 = vmatpush1.msra.mxu0 %v1378
        %1406 = vmatprep.subr.mxu0 0.0
        %1407 = vmatpush1.msra.mxu0 %v1377
        %1408 = vmatprep.subr.mxu0 0.0
        %1409 = vmatpush1.msra.mxu0 %v1376
        %1410 = vmatprep.subr.mxu0 0.0
        %1411 = vmatpush1.msra.mxu0 %v1375
        %1412 = vmatprep.subr.mxu0 0.0
        %1413 = vmatpush1.msra.mxu0 %v1374
        %1414 = vmatprep.subr.mxu0 0.0
        %1415 = vmatpush1.msra.mxu0 %v1373
        %1416 = vmatprep.subr.mxu0 0.0
        %1417 = vmatpush1.msra.mxu0 %v1372
        %1418 = vmatprep.subr.mxu0 0.0
        %1419 = vmatpush1.msra.mxu0 %v1371
        %1420 = vmatprep.subr.mxu0 0.0
        %1421 = vmatpush1.msra.mxu0 %v1370
        %1422 = vmatprep.subr.mxu0 0.0
        %1423 = vmatpush1.msra.mxu0 %v1369
        %1424 = vmatprep.subr.mxu0 0.0
        %1425 = vmatpush2.msra.mxu0 0.0
        %1426 = vmatprep.subr.mxu0 0.0
        %1427 = vmatpush2.msra.mxu0 0.0
        %1428 = vmatprep.subr.mxu0 0.0
        %1429 = vmatpush2.msra.mxu0 0.0
        %1430 = vmatprep.subr.mxu0 0.0
        %1431 = vmatpush2.msra.mxu0 0.0
        %1432 = vmatprep.subr.mxu0 0.0
        %1433 = vmatpush2.msra.mxu0 0.0
        %1434 = vmatprep.subr.mxu0 0.0
        %1435 = vmatpush2.msra.mxu0 0.0
        %1436 = vmatprep.subr.mxu0 0.0
        %1437 = vmatpush2.msra.mxu0 0.0
        %1438 = vmatprep.subr.mxu0 0.0
        %1439 = vmatpush2.msra.mxu0 0.0
        %1440 = vmatprep.subr.mxu0 0.0
        %1441 = vmatpush2.msra.mxu0 0.0
        %1442 = vmatprep.subr.mxu0 0.0
        %1443 = vmatpush2.msra.mxu0 0.0
        %1444 = vmatprep.subr.mxu0 0.0
        %1445 = vmatpush2.msra.mxu0 0.0
        %1446 = vmatprep.subr.mxu0 0.0
        %1447 = vmatpush2.msra.mxu0 0.0
        %1448 = vmatprep.subr.mxu0 0.0
        %1449 = vmatpush2.msra.mxu0 0.0
        %1450 = vmatprep.subr.mxu0 0.0
        %1451 = vmatpush2.msra.mxu0 0.0
        %1452 = vmatprep.subr.mxu0 0.0
        %1453 = vmatpush2.msra.mxu0 0.0
        %1454 = vmatprep.subr.mxu0 0.0
        %1455 = vmatpush2.msra.mxu0 0.0
        %1456 = vmatprep.mubr.f32.mxu0 0.0
        %1457 = vmatmul.mubr.f32.gmra.mxu0 %v1353
        %v1458 = vpop.f32.mrf.mxu0
        %v1459 = vadd.f32 %v1390, %v1458
        %v1460 = vpop.f32.mrf.mxu0
        %1461 = vmatprep.mubr.f32.mxu0 0.0
        %1462 = vmatmul.mubr.f32.gmra.mxu0 %v1354
        %v1463 = vpop.f32.mrf.mxu0
        %v1464 = vadd.f32 %v1390, %v1463
        %v1465 = vpop.f32.mrf.mxu0
        %1466 = vmatprep.mubr.f32.mxu0 0.0
        %1467 = vmatmul.mubr.f32.gmra.mxu0 %v1355
        %v1468 = vpop.f32.mrf.mxu0
        %v1469 = vadd.f32 %v1390, %v1468
        %v1470 = vpop.f32.mrf.mxu0
        %1471 = vmatprep.mubr.f32.mxu0 0.0
        %1472 = vmatmul.mubr.f32.gmra.mxu0 %v1356
        %v1473 = vpop.f32.mrf.mxu0
        %v1474 = vadd.f32 %v1390, %v1473
        %v1475 = vpop.f32.mrf.mxu0
        %1476 = vmatprep.mubr.f32.mxu0 0.0
        %1477 = vmatmul.mubr.f32.gmra.mxu0 %v1357
        %v1478 = vpop.f32.mrf.mxu0
        %v1479 = vadd.f32 %v1390, %v1478
        %v1480 = vpop.f32.mrf.mxu0
        %1481 = vmatprep.mubr.f32.mxu0 0.0
        %1482 = vmatmul.mubr.f32.gmra.mxu0 %v1358
        %v1483 = vpop.f32.mrf.mxu0
        %v1484 = vadd.f32 %v1390, %v1483
        %v1485 = vpop.f32.mrf.mxu0
        %1486 = vmatprep.mubr.f32.mxu0 0.0
        %1487 = vmatmul.mubr.f32.gmra.mxu0 %v1359
        %v1488 = vpop.f32.mrf.mxu0
        %v1489 = vadd.f32 %v1390, %v1488
        %v1490 = vpop.f32.mrf.mxu0
        %1491 = vmatprep.mubr.f32.mxu0 0.0
        %1492 = vmatmul.mubr.f32.gmra.mxu0 %v1360
        %v1493 = vpop.f32.mrf.mxu0
        %v1494 = vadd.f32 %v1390, %v1493
        %v1495 = vpop.f32.mrf.mxu0
        %1496 = vmatprep.mubr.f32.mxu0 0.0
        %1497 = vmatmul.mubr.f32.gmra.mxu0 %v1361
        %v1498 = vpop.f32.mrf.mxu0
        %v1499 = vadd.f32 %v1390, %v1498
        %v1500 = vpop.f32.mrf.mxu0
        %1501 = vmatprep.mubr.f32.mxu0 0.0
        %1502 = vmatmul.mubr.f32.gmra.mxu0 %v1362
        %v1503 = vpop.f32.mrf.mxu0
        %v1504 = vadd.f32 %v1390, %v1503
        %v1505 = vpop.f32.mrf.mxu0
        %1506 = vmatprep.mubr.f32.mxu0 0.0
        %1507 = vmatmul.mubr.f32.gmra.mxu0 %v1363
        %v1508 = vpop.f32.mrf.mxu0
        %v1509 = vadd.f32 %v1390, %v1508
        %v1510 = vpop.f32.mrf.mxu0
        %1511 = vmatprep.mubr.f32.mxu0 0.0
        %1512 = vmatmul.mubr.f32.gmra.mxu0 %v1364
        %v1513 = vpop.f32.mrf.mxu0
        %v1514 = vadd.f32 %v1390, %v1513
        %v1515 = vpop.f32.mrf.mxu0
        %1516 = vmatprep.mubr.f32.mxu0 0.0
        %1517 = vmatmul.mubr.f32.gmra.mxu0 %v1365
        %v1518 = vpop.f32.mrf.mxu0
        %v1519 = vadd.f32 %v1390, %v1518
        %v1520 = vpop.f32.mrf.mxu0
        %1521 = vmatprep.mubr.f32.mxu0 0.0
        %1522 = vmatmul.mubr.f32.gmra.mxu0 %v1366
        %v1523 = vpop.f32.mrf.mxu0
        %v1524 = vadd.f32 %v1390, %v1523
        %v1525 = vpop.f32.mrf.mxu0
        %1526 = vmatprep.mubr.f32.mxu0 0.0
        %1527 = vmatmul.mubr.f32.gmra.mxu0 %v1367
        %v1528 = vpop.f32.mrf.mxu0
        %v1529 = vadd.f32 %v1390, %v1528
        %v1530 = vpop.f32.mrf.mxu0
        %1531 = vmatprep.mubr.f32.mxu0 0.0
        %1532 = vmatmul.mubr.f32.gmra.mxu0 %v1368
        %v1533 = vpop.f32.mrf.mxu0
        %v1534 = vadd.f32 %v1390, %v1533
        %v1535 = vpop.f32.mrf.mxu0
        %1536 = vdwg.mxu0
        %v1537 = vmax.f32 %v1459, 0.0
        %v1538 = vmax.f32 %v1464, 0.0
        %v1539 = vmax.f32 %v1469, 0.0
        %v1540 = vmax.f32 %v1474, 0.0
        %v1541 = vmax.f32 %v1479, 0.0
        %v1542 = vmax.f32 %v1484, 0.0
        %v1543 = vmax.f32 %v1489, 0.0
        %v1544 = vmax.f32 %v1494, 0.0
        %v1545 = vmax.f32 %v1499, 0.0
        %v1546 = vmax.f32 %v1504, 0.0
        %v1547 = vmax.f32 %v1509, 0.0
        %v1548 = vmax.f32 %v1514, 0.0
        %v1549 = vmax.f32 %v1519, 0.0
        %v1550 = vmax.f32 %v1524, 0.0
        %v1551 = vmax.f32 %v1529, 0.0
        %v1552 = vmax.f32 %v1534, 0.0
        %v1553 = vld [vmem:[#allocation11] sm:$0xff]
        %v1554 = vld [vmem:[#allocation11 + $0x8] sm:$0xff]
        %v1555 = vld [vmem:[#allocation11 + $0x10] sm:$0xff]
        %v1556 = vld [vmem:[#allocation11 + $0x18] sm:$0xff]
        %v1557 = vld [vmem:[#allocation11 + $0x20] sm:$0xff]
        %v1558 = vld [vmem:[#allocation11 + $0x28] sm:$0xff]
        %v1559 = vld [vmem:[#allocation11 + $0x30] sm:$0xff]
        %v1560 = vld [vmem:[#allocation11 + $0x38] sm:$0xff]
        %v1561 = vld [vmem:[#allocation11 + $0x40] sm:$0xff]
        %v1562 = vld [vmem:[#allocation11 + $0x48] sm:$0xff]
        %v1563 = vld [vmem:[#allocation11 + $0x50] sm:$0xff]
        %v1564 = vld [vmem:[#allocation11 + $0x58] sm:$0xff]
        %v1565 = vld [vmem:[#allocation11 + $0x60] sm:$0xff]
        %v1566 = vld [vmem:[#allocation11 + $0x68] sm:$0xff]
        %v1567 = vld [vmem:[#allocation11 + $0x70] sm:$0xff]
        %v1568 = vld [vmem:[#allocation11 + $0x78] sm:$0xff]
        %v1569 = vld [vmem:[%s9] sm:$0x1]
        %v1571 = vlaneseq
        %v1572 = vshrl.u32 %v1571, 7
        %v1573 = vsub.s32 0, %v1572
        %v1574 = vrot.slane %v1569, %v1573
        %1576 = vmatprep.subr.mxu0 0.0
        %1577 = vmatpush1.msra.mxu0 %v1568
        %1578 = vmatprep.subr.mxu0 0.0
        %1579 = vmatpush1.msra.mxu0 %v1567
        %1580 = vmatprep.subr.mxu0 0.0
        %1581 = vmatpush1.msra.mxu0 %v1566
        %1582 = vmatprep.subr.mxu0 0.0
        %1583 = vmatpush1.msra.mxu0 %v1565
        %1584 = vmatprep.subr.mxu0 0.0
        %1585 = vmatpush1.msra.mxu0 %v1564
        %1586 = vmatprep.subr.mxu0 0.0
        %1587 = vmatpush1.msra.mxu0 %v1563
        %1588 = vmatprep.subr.mxu0 0.0
        %1589 = vmatpush1.msra.mxu0 %v1562
        %1590 = vmatprep.subr.mxu0 0.0
        %1591 = vmatpush1.msra.mxu0 %v1561
        %1592 = vmatprep.subr.mxu0 0.0
        %1593 = vmatpush1.msra.mxu0 %v1560
        %1594 = vmatprep.subr.mxu0 0.0
        %1595 = vmatpush1.msra.mxu0 %v1559
        %1596 = vmatprep.subr.mxu0 0.0
        %1597 = vmatpush1.msra.mxu0 %v1558
        %1598 = vmatprep.subr.mxu0 0.0
        %1599 = vmatpush1.msra.mxu0 %v1557
        %1600 = vmatprep.subr.mxu0 0.0
        %1601 = vmatpush1.msra.mxu0 %v1556
        %1602 = vmatprep.subr.mxu0 0.0
        %1603 = vmatpush1.msra.mxu0 %v1555
        %1604 = vmatprep.subr.mxu0 0.0
        %1605 = vmatpush1.msra.mxu0 %v1554
        %1606 = vmatprep.subr.mxu0 0.0
        %1607 = vmatpush1.msra.mxu0 %v1553
        %1608 = vmatprep.subr.mxu0 0.0
        %1609 = vmatpush2.msra.mxu0 0.0
        %1610 = vmatprep.subr.mxu0 0.0
        %1611 = vmatpush2.msra.mxu0 0.0
        %1612 = vmatprep.subr.mxu0 0.0
        %1613 = vmatpush2.msra.mxu0 0.0
        %1614 = vmatprep.subr.mxu0 0.0
        %1615 = vmatpush2.msra.mxu0 0.0
        %1616 = vmatprep.subr.mxu0 0.0
        %1617 = vmatpush2.msra.mxu0 0.0
        %1618 = vmatprep.subr.mxu0 0.0
        %1619 = vmatpush2.msra.mxu0 0.0
        %1620 = vmatprep.subr.mxu0 0.0
        %1621 = vmatpush2.msra.mxu0 0.0
        %1622 = vmatprep.subr.mxu0 0.0
        %1623 = vmatpush2.msra.mxu0 0.0
        %1624 = vmatprep.subr.mxu0 0.0
        %1625 = vmatpush2.msra.mxu0 0.0
        %1626 = vmatprep.subr.mxu0 0.0
        %1627 = vmatpush2.msra.mxu0 0.0
        %1628 = vmatprep.subr.mxu0 0.0
        %1629 = vmatpush2.msra.mxu0 0.0
        %1630 = vmatprep.subr.mxu0 0.0
        %1631 = vmatpush2.msra.mxu0 0.0
        %1632 = vmatprep.subr.mxu0 0.0
        %1633 = vmatpush2.msra.mxu0 0.0
        %1634 = vmatprep.subr.mxu0 0.0
        %1635 = vmatpush2.msra.mxu0 0.0
        %1636 = vmatprep.subr.mxu0 0.0
        %1637 = vmatpush2.msra.mxu0 0.0
        %1638 = vmatprep.subr.mxu0 0.0
        %1639 = vmatpush2.msra.mxu0 0.0
        %1640 = vmatprep.mubr.f32.mxu0 0.0
        %1641 = vmatmul.mubr.f32.gmra.mxu0 %v1537
        %v1642 = vpop.f32.mrf.mxu0
        %v1643 = vadd.f32 %v1574, %v1642
        %v1644 = vpop.f32.mrf.mxu0
        %1645 = vmatprep.mubr.f32.mxu0 0.0
        %1646 = vmatmul.mubr.f32.gmra.mxu0 %v1538
        %v1647 = vpop.f32.mrf.mxu0
        %v1648 = vadd.f32 %v1574, %v1647
        %v1649 = vpop.f32.mrf.mxu0
        %1650 = vmatprep.mubr.f32.mxu0 0.0
        %1651 = vmatmul.mubr.f32.gmra.mxu0 %v1539
        %v1652 = vpop.f32.mrf.mxu0
        %v1653 = vadd.f32 %v1574, %v1652
        %v1654 = vpop.f32.mrf.mxu0
        %1655 = vmatprep.mubr.f32.mxu0 0.0
        %1656 = vmatmul.mubr.f32.gmra.mxu0 %v1540
        %v1657 = vpop.f32.mrf.mxu0
        %v1658 = vadd.f32 %v1574, %v1657
        %v1659 = vpop.f32.mrf.mxu0
        %1660 = vmatprep.mubr.f32.mxu0 0.0
        %1661 = vmatmul.mubr.f32.gmra.mxu0 %v1541
        %v1662 = vpop.f32.mrf.mxu0
        %v1663 = vadd.f32 %v1574, %v1662
        %v1664 = vpop.f32.mrf.mxu0
        %1665 = vmatprep.mubr.f32.mxu0 0.0
        %1666 = vmatmul.mubr.f32.gmra.mxu0 %v1542
        %v1667 = vpop.f32.mrf.mxu0
        %v1668 = vadd.f32 %v1574, %v1667
        %v1669 = vpop.f32.mrf.mxu0
        %1670 = vmatprep.mubr.f32.mxu0 0.0
        %1671 = vmatmul.mubr.f32.gmra.mxu0 %v1543
        %v1672 = vpop.f32.mrf.mxu0
        %v1673 = vadd.f32 %v1574, %v1672
        %v1674 = vpop.f32.mrf.mxu0
        %1675 = vmatprep.mubr.f32.mxu0 0.0
        %1676 = vmatmul.mubr.f32.gmra.mxu0 %v1544
        %v1677 = vpop.f32.mrf.mxu0
        %v1678 = vadd.f32 %v1574, %v1677
        %v1679 = vpop.f32.mrf.mxu0
        %1680 = vmatprep.mubr.f32.mxu0 0.0
        %1681 = vmatmul.mubr.f32.gmra.mxu0 %v1545
        %v1682 = vpop.f32.mrf.mxu0
        %v1683 = vadd.f32 %v1574, %v1682
        %v1684 = vpop.f32.mrf.mxu0
        %1685 = vmatprep.mubr.f32.mxu0 0.0
        %1686 = vmatmul.mubr.f32.gmra.mxu0 %v1546
        %v1687 = vpop.f32.mrf.mxu0
        %v1688 = vadd.f32 %v1574, %v1687
        %v1689 = vpop.f32.mrf.mxu0
        %1690 = vmatprep.mubr.f32.mxu0 0.0
        %1691 = vmatmul.mubr.f32.gmra.mxu0 %v1547
        %v1692 = vpop.f32.mrf.mxu0
        %v1693 = vadd.f32 %v1574, %v1692
        %v1694 = vpop.f32.mrf.mxu0
        %1695 = vmatprep.mubr.f32.mxu0 0.0
        %1696 = vmatmul.mubr.f32.gmra.mxu0 %v1548
        %v1697 = vpop.f32.mrf.mxu0
        %v1698 = vadd.f32 %v1574, %v1697
        %v1699 = vpop.f32.mrf.mxu0
        %1700 = vmatprep.mubr.f32.mxu0 0.0
        %1701 = vmatmul.mubr.f32.gmra.mxu0 %v1549
        %v1702 = vpop.f32.mrf.mxu0
        %v1703 = vadd.f32 %v1574, %v1702
        %v1704 = vpop.f32.mrf.mxu0
        %1705 = vmatprep.mubr.f32.mxu0 0.0
        %1706 = vmatmul.mubr.f32.gmra.mxu0 %v1550
        %v1707 = vpop.f32.mrf.mxu0
        %v1708 = vadd.f32 %v1574, %v1707
        %v1709 = vpop.f32.mrf.mxu0
        %1710 = vmatprep.mubr.f32.mxu0 0.0
        %1711 = vmatmul.mubr.f32.gmra.mxu0 %v1551
        %v1712 = vpop.f32.mrf.mxu0
        %v1713 = vadd.f32 %v1574, %v1712
        %v1714 = vpop.f32.mrf.mxu0
        %1715 = vmatprep.mubr.f32.mxu0 0.0
        %1716 = vmatmul.mubr.f32.gmra.mxu0 %v1552
        %v1717 = vpop.f32.mrf.mxu0
        %v1718 = vadd.f32 %v1574, %v1717
        %v1719 = vpop.f32.mrf.mxu0
        %1720 = vdwg.mxu0
        %v1721 = vxor.u32 %v1643, 2147483648
        %v1722 = vxor.u32 %v1648, 2147483648
        %v1723 = vxor.u32 %v1653, 2147483648
        %v1724 = vxor.u32 %v1658, 2147483648
        %v1725 = vxor.u32 %v1663, 2147483648
        %v1726 = vxor.u32 %v1668, 2147483648
        %v1727 = vxor.u32 %v1673, 2147483648
        %v1728 = vxor.u32 %v1678, 2147483648
        %v1729 = vxor.u32 %v1683, 2147483648
        %v1730 = vxor.u32 %v1688, 2147483648
        %v1731 = vxor.u32 %v1693, 2147483648
        %v1732 = vxor.u32 %v1698, 2147483648
        %v1733 = vxor.u32 %v1703, 2147483648
        %v1734 = vxor.u32 %v1708, 2147483648
        %v1735 = vxor.u32 %v1713, 2147483648
        %v1736 = vxor.u32 %v1718, 2147483648
        %v1737 = vmul.f32 %v1721, 1.442695
        %v1738 = vpow.pop %v1737
        %v1739 = vmul.f32 %v1722, 1.442695
        %v1740 = vpow.pop %v1739
        %v1741 = vmul.f32 %v1723, 1.442695
        %v1742 = vpow.pop %v1741
        %v1743 = vmul.f32 %v1724, 1.442695
        %v1744 = vpow.pop %v1743
        %v1745 = vmul.f32 %v1725, 1.442695
        %v1746 = vpow.pop %v1745
        %v1747 = vmul.f32 %v1726, 1.442695
        %v1748 = vpow.pop %v1747
        %v1749 = vmul.f32 %v1727, 1.442695
        %v1750 = vpow.pop %v1749
        %v1751 = vmul.f32 %v1728, 1.442695
        %v1752 = vpow.pop %v1751
        %v1753 = vmul.f32 %v1729, 1.442695
        %v1754 = vpow.pop %v1753
        %v1755 = vmul.f32 %v1730, 1.442695
        %v1756 = vpow.pop %v1755
        %v1757 = vmul.f32 %v1731, 1.442695
        %v1758 = vpow.pop %v1757
        %v1759 = vmul.f32 %v1732, 1.442695
        %v1760 = vpow.pop %v1759
        %v1761 = vmul.f32 %v1733, 1.442695
        %v1762 = vpow.pop %v1761
        %v1763 = vmul.f32 %v1734, 1.442695
        %v1764 = vpow.pop %v1763
        %v1765 = vmul.f32 %v1735, 1.442695
        %v1766 = vpow.pop %v1765
        %v1767 = vmul.f32 %v1736, 1.442695
        %v1768 = vpow.pop %v1767
        %v1769 = vadd.f32 %v1738, 1.0
        %v1770 = vadd.f32 %v1740, 1.0
        %v1771 = vadd.f32 %v1742, 1.0
        %v1772 = vadd.f32 %v1744, 1.0
        %v1773 = vadd.f32 %v1746, 1.0
        %v1774 = vadd.f32 %v1748, 1.0
        %v1775 = vadd.f32 %v1750, 1.0
        %v1776 = vadd.f32 %v1752, 1.0
        %v1777 = vadd.f32 %v1754, 1.0
        %v1778 = vadd.f32 %v1756, 1.0
        %v1779 = vadd.f32 %v1758, 1.0
        %v1780 = vadd.f32 %v1760, 1.0
        %v1781 = vadd.f32 %v1762, 1.0
        %v1782 = vadd.f32 %v1764, 1.0
        %v1783 = vadd.f32 %v1766, 1.0
        %v1784 = vadd.f32 %v1768, 1.0
        %v1785 = vrcp.pop %v1769
        %v1786 = vmul.f32 1.0, %v1785
        %v1787 = vrcp.pop %v1770
        %v1788 = vmul.f32 1.0, %v1787
        %v1789 = vrcp.pop %v1771
        %v1790 = vmul.f32 1.0, %v1789
        %v1791 = vrcp.pop %v1772
        %v1792 = vmul.f32 1.0, %v1791
        %v1793 = vrcp.pop %v1773
        %v1794 = vmul.f32 1.0, %v1793
        %v1795 = vrcp.pop %v1774
        %v1796 = vmul.f32 1.0, %v1795
        %v1797 = vrcp.pop %v1775
        %v1798 = vmul.f32 1.0, %v1797
        %v1799 = vrcp.pop %v1776
        %v1800 = vmul.f32 1.0, %v1799
        %v1801 = vrcp.pop %v1777
        %v1802 = vmul.f32 1.0, %v1801
        %v1803 = vrcp.pop %v1778
        %v1804 = vmul.f32 1.0, %v1803
        %v1805 = vrcp.pop %v1779
        %v1806 = vmul.f32 1.0, %v1805
        %v1807 = vrcp.pop %v1780
        %v1808 = vmul.f32 1.0, %v1807
        %v1809 = vrcp.pop %v1781
        %v1810 = vmul.f32 1.0, %v1809
        %v1811 = vrcp.pop %v1782
        %v1812 = vmul.f32 1.0, %v1811
        %v1813 = vrcp.pop %v1783
        %v1814 = vmul.f32 1.0, %v1813
        %v1815 = vrcp.pop %v1784
        %v1816 = vmul.f32 1.0, %v1815
        %1817 = vst [vmem:[%s570] sm:$0xff] %v1786
        %1818 = vst [vmem:[%s570 + $0x8] sm:$0xff] %v1788
        %1819 = vst [vmem:[%s570 + $0x10] sm:$0xff] %v1790
        %1820 = vst [vmem:[%s570 + $0x18] sm:$0xff] %v1792
        %1821 = vst [vmem:[%s570 + $0x20] sm:$0xff] %v1794
        %1822 = vst [vmem:[%s570 + $0x28] sm:$0xff] %v1796
        %1823 = vst [vmem:[%s570 + $0x30] sm:$0xff] %v1798
        %1824 = vst [vmem:[%s570 + $0x38] sm:$0xff] %v1800
        %1825 = vst [vmem:[%s570 + $0x40] sm:$0xff] %v1802
        %1826 = vst [vmem:[%s570 + $0x48] sm:$0xff] %v1804
        %1827 = vst [vmem:[%s570 + $0x50] sm:$0xff] %v1806
        %1828 = vst [vmem:[%s570 + $0x58] sm:$0xff] %v1808
        %1829 = vst [vmem:[%s570 + $0x60] sm:$0xff] %v1810
        %1830 = vst [vmem:[%s570 + $0x68] sm:$0xff] %v1812
        %1831 = vst [vmem:[%s570 + $0x70] sm:$0xff] %v1814
        %1832 = vst [vmem:[%s570 + $0x78] sm:$0xff] %v1816
        %1833 = vst [vmem:[%s577] sm:$0xff] %v1195
        %1834 = vst [vmem:[%s577 + $0x8] sm:$0xff] %v1197
        %1835 = vst [vmem:[%s577 + $0x10] sm:$0xff] %v1201
        %1836 = vst [vmem:[%s577 + $0x18] sm:$0xff] %v1203
        %1837 = vst [vmem:[%s577 + $0x20] sm:$0xff] %v1207
        %1838 = vst [vmem:[%s577 + $0x28] sm:$0xff] %v1209
        %1839 = vst [vmem:[%s577 + $0x30] sm:$0xff] %v1213
        %1840 = vst [vmem:[%s577 + $0x38] sm:$0xff] %v1215
        %1841 = vst [vmem:[%s577 + $0x40] sm:$0xff] %v1219
        %1842 = vst [vmem:[%s577 + $0x48] sm:$0xff] %v1221
        %1843 = vst [vmem:[%s577 + $0x50] sm:$0xff] %v1225
        %1844 = vst [vmem:[%s577 + $0x58] sm:$0xff] %v1227
        %1845 = vst [vmem:[%s577 + $0x60] sm:$0xff] %v1231
        %1846 = vst [vmem:[%s577 + $0x68] sm:$0xff] %v1233
        %1847 = vst [vmem:[%s577 + $0x70] sm:$0xff] %v1237
        %1848 = vst [vmem:[%s577 + $0x78] sm:$0xff] %v1239
        %1849 = vst [vmem:[%s577 + $0x80] sm:$0xff] %v1243
        %1850 = vst [vmem:[%s577 + $0x88] sm:$0xff] %v1245
        %1851 = vst [vmem:[%s577 + $0x90] sm:$0xff] %v1249
        %1852 = vst [vmem:[%s577 + $0x98] sm:$0xff] %v1251
        %1853 = vst [vmem:[%s577 + $0xa0] sm:$0xff] %v1255
        %1854 = vst [vmem:[%s577 + $0xa8] sm:$0xff] %v1257
        %1855 = vst [vmem:[%s577 + $0xb0] sm:$0xff] %v1261
        %1856 = vst [vmem:[%s577 + $0xb8] sm:$0xff] %v1263
        %1857 = vst [vmem:[%s577 + $0xc0] sm:$0xff] %v1267
        %1858 = vst [vmem:[%s577 + $0xc8] sm:$0xff] %v1269
        %1859 = vst [vmem:[%s577 + $0xd0] sm:$0xff] %v1273
        %1860 = vst [vmem:[%s577 + $0xd8] sm:$0xff] %v1275
        %1861 = vst [vmem:[%s577 + $0xe0] sm:$0xff] %v1279
        %1862 = vst [vmem:[%s577 + $0xe8] sm:$0xff] %v1281
        %1863 = vst [vmem:[%s577 + $0xf0] sm:$0xff] %v1285
        %1864 = vst [vmem:[%s577 + $0xf8] sm:$0xff] %v1287
        %s1865 = sand.u32 %s292, 1
        %s1866 = scalar_lea.sflag [#allocation4], %s1865
        %s1867 = sand.u32 %s292, 1
        %s1868 = smul.addr %s1867, 128
        %s1869 = scalar_lea.vmem [#allocation14], %s1868
        %s1870 = sand.u32 %s318, 1
        %s1871 = scalar_lea.sflag [#allocation16], %s1870
        %s1872 = sand.u32 %s318, 1
        %s1873 = smul.addr %s1872, 256
        %s1874 = scalar_lea.vmem [#allocation15], %s1873
        // Predicated region
        $region93: #{tpu_custom_call.1} parent=63 // pred_check
          %p1875 = pneg %p302
        $region94: #{tpu_custom_call.1} parent=63 // pred_check_branch
          %1877 = sbr.rel (%p1875) target = $region96
        $region95: #{tpu_custom_call.1} parent=63 // pred_region
          %s1879 = ssub.s32 2048, 2048
          %1880 = vsyncadd %s1866, %s1879
          %s1881 = smul.addr %s38, 16
          %s1882 = smul.addr %s1881, 128
          %s1883 = scalar_lea.hbm %s11, %s1882
          %s1884 = sshll.u32 %s1869, 4
          %s1885 = int_to_ptr.vmem [resolvable:$true] %s1884
          %1890 = dma.vmem_to_hbm [thread:$0]  %s1885, 2048, %s1883, %s1866, 128, 128, 8
        $region96: #{tpu_custom_call.1} parent=63 // pred_fallthru
          _
        // Predicated region
        $region97: #{tpu_custom_call.1} parent=63 // pred_check
          %p1891 = pneg %p328
        $region98: #{tpu_custom_call.1} parent=63 // pred_check_branch
          %1893 = sbr.rel (%p1891) target = $region100
        $region99: #{tpu_custom_call.1} parent=63 // pred_region
          %s1895 = ssub.s32 4096, 4096
          %1896 = vsyncadd %s1871, %s1895
          %s1897 = smul.addr %s38, 32
          %s1898 = smul.addr %s1897, 128
          %s1899 = scalar_lea.hbm %s12, %s1898
          %s1900 = sshll.u32 %s1874, 4
          %s1901 = int_to_ptr.vmem [resolvable:$true] %s1900
          %1906 = dma.vmem_to_hbm [thread:$0]  %s1901, 4096, %s1899, %s1871, 256, 256, 16
        $region100: #{tpu_custom_call.1} parent=63 // pred_fallthru
          _
      $region64: #{tpu_custom_call.1} parent=5 // pred_fallthru
        _
      %p1907 = scmp.le.s32.totalorder 2, %s33
      // Predicated region
      $region101: #{tpu_custom_call.1} parent=5 // pred_check
        %p1908 = pneg %p1907
      $region102: #{tpu_custom_call.1} parent=5 // pred_check_branch
        %1910 = sbr.rel (%p1908) target = $region104
      $region103: #{tpu_custom_call.1} parent=5 // pred_region
        %s1911 = ssub.s32 %s33, 2
        // Predicated region
        $region105: #{tpu_custom_call.1} parent=103 // pred_check
          %p1912 = pneg %p308
        $region106: #{tpu_custom_call.1} parent=103 // pred_check_branch
          %1914 = sbr.rel (%p1912) target = $region108
        $region107: #{tpu_custom_call.1} parent=103 // pred_region
          %s1915 = sand.u32 %s293, 1
          %s1916 = scalar_lea.sflag [#allocation4], %s1915
          %s1917 = sand.u32 %s293, 1
          %s1918 = smul.addr %s1917, 128
          %s1919 = scalar_lea.vmem [#allocation14], %s1918
          %1920 = dma.done %s1916, 2048
        $region108: #{tpu_custom_call.1} parent=103 // pred_fallthru
          _
        // Predicated region
        $region109: #{tpu_custom_call.1} parent=103 // pred_check
          %p1921 = pneg %p334
        $region110: #{tpu_custom_call.1} parent=103 // pred_check_branch
          %1923 = sbr.rel (%p1921) target = $region112
        $region111: #{tpu_custom_call.1} parent=103 // pred_region
          %s1924 = sand.u32 %s319, 1
          %s1925 = scalar_lea.sflag [#allocation16], %s1924
          %s1926 = sand.u32 %s319, 1
          %s1927 = smul.addr %s1926, 256
          %s1928 = scalar_lea.vmem [#allocation15], %s1927
          %1929 = dma.done %s1925, 4096
        $region112: #{tpu_custom_call.1} parent=103 // pred_fallthru
          _
      $region104: #{tpu_custom_call.1} parent=5 // pred_fallthru
        _
    $region6: #{tpu_custom_call.1} parent=1 // loop_footer
      %s37 = sadd.s32 1, %s33
    $region7: #{tpu_custom_call.1} parent=1 // loop_footer_branch
      %32 = sbr.rel target = $region3
    $region8: #{tpu_custom_call.1} parent=1 // loop_exit
      _
    %1930 = vsyncpa [#allocation3], 1
    %s1931 = scalar_lea.sflag [#allocation3], 1
    %1932 = vsyncpa %s1931, 1
    %1933 = vsyncpa [#allocation6], 1
    %s1934 = scalar_lea.sflag [#allocation6], 1
    %1935 = vsyncpa %s1934, 1
    %1936 = vsyncpa [#allocation9], 1
    %1937 = vsyncpa [#allocation12], 1
    %1938 = vsyncpa [#allocation4], 1
    %s1939 = scalar_lea.sflag [#allocation4], 1
    %1940 = vsyncpa %s1939, 1
    %1941 = vsyncpa [#allocation16], 1
    %s1942 = scalar_lea.sflag [#allocation16], 1
    %1943 = vsyncpa %s1942, 1

</llo_original>
